<compile_context>
chip_gen: v5e
topology: v5e:2x2
jax: 0.10.0
libtpu: 0.0.40
codegen_flags: <defaults>
</compile_context>

<pallas_src>
import functools
import math

import jax
import jax.numpy as jnp
from jax.experimental import pallas as pl
from jax.experimental.pallas import tpu as pltpu


_VMEM = pl.BlockSpec(memory_space=pltpu.MemorySpace.VMEM)
_CLS_PAD = 128  # lane-dense classifier output width


CFG = dict(
    vocab_size=100,
    max_pos=16,
    type_vocab=2,
    hidden=32,
    num_heads=2,
    num_layers=2,
    intermediate=64,
    num_classes=5,
)


# ----------------------- packed f32 parameter-slab layout --------------------

def _slab_layout(cfg, B, S):
    """Row offsets of every small f32 parameter inside one (rows, 128) slab."""
    L = cfg["num_layers"]
    V = cfg["vocab_size"]
    BS = B * S
    Vp = ((V + 127) // 128) * 128          # vocab rows padded -> aligned one-hot K
    off = {"Vp": Vp, "word_emb": 0, "pos_type": Vp,
           "emb_ln_g": Vp + BS, "emb_ln_b": Vp + BS + 1}
    r = Vp + BS + 2
    off["layers"] = []
    for _ in range(L):
        # per-layer rows: [bqkv, bo, ln1_g, ln1_b, b1, b2, ln2_g, ln2_b]
        off["layers"].append(r)
        r += 8
    off["pool_b"] = r
    off["cls_b"] = r + 1
    off["total"] = r + 2
    return off


# ----------------------------- fused Pallas kernel ---------------------------

def fused_bert_kernel(ids_ref, mask_ref, slab_ref, wqkv_ref, wo_ref, w1_ref,
                      w2_ref, pool_w_ref, cls_w_ref, out_ref, *,
                      B, S, H, NH, Dh, L, I, scale, off):
    f32 = jnp.float32
    bf16 = jnp.bfloat16
    BS = B * S
    Vp = off["Vp"]

    def row(r, width):
        return slab_ref[r:r + 1, :width]                         # (1, width) f32

    def layer_norm(h, g, b):
        mu = jnp.mean(h, axis=-1, keepdims=True)
        d = h - mu
        var = jnp.mean(d * d, axis=-1, keepdims=True)
        return d * jax.lax.rsqrt(var + 1e-12) * g + b

    def gelu(x):
        # TODO(synk): HF BertModel default is the exact (erf) GELU; tanh
        # approximation used here (~1e-3 logit difference).
        c = math.sqrt(2.0 / math.pi)
        return 0.5 * x * (1.0 + jnp.tanh(c * (x + 0.044715 * x * x * x)))

    # ---- embedding gather (one-hot MXU matmul, exact) + pos/type + LN ------
    onehot = (jax.lax.broadcasted_iota(jnp.int32, (BS, Vp), 1)
              == ids_ref[...]).astype(f32)                       # (BS, Vp)
    emb = jnp.dot(onehot,
                  slab_ref[off["word_emb"]:off["word_emb"] + Vp, :H],
                  preferred_element_type=f32)                    # (BS, H)
    emb = emb + slab_ref[off["pos_type"]:off["pos_type"] + BS, :H]
    x = layer_norm(emb, row(off["emb_ln_g"], H), row(off["emb_ln_b"], H))

    # ---- additive attention-mask bias, hoisted out of the layer loop -------
    mask = mask_ref[...].astype(f32)                             # (B, S)
    mbias = jnp.broadcast_to(((1.0 - mask) * -10000.0)[:, None, :], (B, S, S))

    # ---- encoder layers (statically unrolled) -------------------------------
    for l in range(L):
        base = off["layers"][l]
        # fused QKV projection: one MXU pass, N = 3H
        qkv = jnp.dot(x.astype(bf16), wqkv_ref[l],
                      preferred_element_type=f32) + row(base + 0, 3 * H)

        ctx_heads = []
        for h in range(NH):
            qh = qkv[:, h * Dh:(h + 1) * Dh].reshape(B, S, Dh)
            kh = qkv[:, H + h * Dh:H + (h + 1) * Dh].reshape(B, S, Dh)
            vh = qkv[:, 2 * H + h * Dh:2 * H + (h + 1) * Dh].reshape(B, S, Dh)

            s = jax.lax.dot_general(qh.astype(bf16), kh.astype(bf16),
                                    (((2,), (2,)), ((0,), (0,))),
                                    preferred_element_type=f32)  # (B, S, S)
            s = s * scale + mbias
            s = s - jnp.max(s, axis=-1, keepdims=True)
            p = jnp.exp(s)
            p = p * pl.reciprocal(jnp.sum(p, axis=-1, keepdims=True),
                                  approx=True)

            ctx = jax.lax.dot_general(p.astype(bf16), vh.astype(bf16),
                                      (((2,), (1,)), ((0,), (0,))),
                                      preferred_element_type=f32)  # (B, S, Dh)
            ctx_heads.append(ctx.reshape(BS, Dh))

        # merge heads on lanes, then a SINGLE output-projection matmul
        ctx_all = jnp.concatenate(ctx_heads, axis=-1)            # (BS, H)
        attn = jnp.dot(ctx_all.astype(bf16), wo_ref[l],
                       preferred_element_type=f32) + row(base + 1, H)
        x = layer_norm(x + attn, row(base + 2, H), row(base + 3, H))

        # feed forward
        h1 = gelu(jnp.dot(x.astype(bf16), w1_ref[l],
                          preferred_element_type=f32) + row(base + 4, I))
        ffn = jnp.dot(h1.astype(bf16), w2_ref[l],
                      preferred_element_type=f32) + row(base + 5, H)
        x = layer_norm(x + ffn, row(base + 6, H), row(base + 7, H))

    # ---- pooler: tanh(W * hidden[:, 0] + b) ---------------------------------
    cls_tok = x.reshape(B, S, H)[:, 0, :]                        # (B, H)
    pooled = jnp.tanh(jnp.dot(cls_tok.astype(bf16), pool_w_ref[...],
                              preferred_element_type=f32) + row(off["pool_b"], H))

    # TODO(synk): dropout(p=0.1) omitted — eval-mode identity.

    # ---- classifier head (lane-padded to 128 outputs, unmasked store) ------
    out_ref[...] = (jnp.dot(pooled.astype(bf16), cls_w_ref[...],
                            preferred_element_type=f32) + row(off["cls_b"], _CLS_PAD))


# --------------------------- one-time weight packing -------------------------

def prepack_params(params, cfg, B, S):
    """Pack params ONCE (outside the per-call jit) into the kernel operand set."""
    H = cfg["hidden"]
    V, C = cfg["vocab_size"], cfg["num_classes"]
    BS = B * S
    off = _slab_layout(cfg, B, S)
    layers = params["layers"]
    bf16 = jnp.bfloat16

    slab = jnp.zeros((off["total"], 128), jnp.float32)

    def set_row(sl, r, vec):
        vec = jnp.asarray(vec, jnp.float32).reshape(-1)
        return sl.at[r, :vec.shape[0]].set(vec)

    slab = slab.at[off["word_emb"]:off["word_emb"] + V, :H].set(params["word_emb"])
    # positional + token-type(=0) embeddings pre-summed, tiled over batch.
    # TODO(synk): token_type_ids hard-coded to 0 (reference call uses default).
    pos_type = params["pos_emb"][:S] + params["type_emb"][0][None, :]
    slab = slab.at[off["pos_type"]:off["pos_type"] + BS, :H].set(
        jnp.tile(pos_type, (B, 1)))
    slab = set_row(slab, off["emb_ln_g"], params["emb_ln_g"])
    slab = set_row(slab, off["emb_ln_b"], params["emb_ln_b"])
    for l, lp in enumerate(layers):
        base = off["layers"][l]
        slab = set_row(slab, base + 0,
                       jnp.concatenate([lp["bq"], lp["bk"], lp["bv"]]))
        slab = set_row(slab, base + 1, lp["bo"])
        slab = set_row(slab, base + 2, lp["ln1_g"])
        slab = set_row(slab, base + 3, lp["ln1_b"])
        slab = set_row(slab, base + 4, lp["b1"])
        slab = set_row(slab, base + 5, lp["b2"])
        slab = set_row(slab, base + 6, lp["ln2_g"])
        slab = set_row(slab, base + 7, lp["ln2_b"])
    slab = set_row(slab, off["pool_b"], params["pooler_b"])
    slab = set_row(slab, off["cls_b"], params["cls_b"])        # rest stays zero

    packed = dict(
        slab=slab,
        wqkv=jnp.stack([jnp.concatenate([lp["wq"], lp["wk"], lp["wv"]], axis=1)
                        for lp in layers]).astype(bf16),        # (L, H, 3H)
        wo=jnp.stack([lp["wo"] for lp in layers]).astype(bf16),  # (L, H, H)
        w1=jnp.stack([lp["w1"] for lp in layers]).astype(bf16),  # (L, H, I)
        w2=jnp.stack([lp["w2"] for lp in layers]).astype(bf16),  # (L, I, H)
        pool_w=params["pooler_w"].astype(bf16),                  # (H, H)
        cls_w=(jnp.zeros((H, _CLS_PAD), jnp.float32)
               .at[:, :C].set(params["cls_w"]).astype(bf16)),    # (H, 128)
    )
    return packed


# --------------------------- model definition --------------------------------

def init_params(key, cfg):
    def nrm(k, shape):
        return 0.02 * jax.random.normal(k, shape, dtype=jnp.float32)

    keys = iter(jax.random.split(key, 64))
    H, I = cfg["hidden"], cfg["intermediate"]
    p = {
        "word_emb": nrm(next(keys), (cfg["vocab_size"], H)),
        "pos_emb": nrm(next(keys), (cfg["max_pos"], H)),
        "type_emb": nrm(next(keys), (cfg["type_vocab"], H)),
        "emb_ln_g": jnp.ones((H,), jnp.float32),
        "emb_ln_b": jnp.zeros((H,), jnp.float32),
        "layers": [],
        "pooler_w": nrm(next(keys), (H, H)),
        "pooler_b": jnp.zeros((H,), jnp.float32),
        "cls_w": nrm(next(keys), (H, cfg["num_classes"])),
        "cls_b": jnp.zeros((cfg["num_classes"],), jnp.float32),
    }
    for _ in range(cfg["num_layers"]):
        p["layers"].append({
            "wq": nrm(next(keys), (H, H)), "bq": jnp.zeros((H,), jnp.float32),
            "wk": nrm(next(keys), (H, H)), "bk": jnp.zeros((H,), jnp.float32),
            "wv": nrm(next(keys), (H, H)), "bv": jnp.zeros((H,), jnp.float32),
            "wo": nrm(next(keys), (H, H)), "bo": jnp.zeros((H,), jnp.float32),
            "ln1_g": jnp.ones((H,), jnp.float32),
            "ln1_b": jnp.zeros((H,), jnp.float32),
            "w1": nrm(next(keys), (H, I)), "b1": jnp.zeros((I,), jnp.float32),
            "w2": nrm(next(keys), (I, H)), "b2": jnp.zeros((H,), jnp.float32),
            "ln2_g": jnp.ones((H,), jnp.float32),
            "ln2_b": jnp.zeros((H,), jnp.float32),
        })
    return p


def intent_classifier_forward(packed, input_ids, attention_mask, *, cfg):
    B, S = input_ids.shape
    H, NH, L = cfg["hidden"], cfg["num_heads"], cfg["num_layers"]
    I, C = cfg["intermediate"], cfg["num_classes"]
    Dh = H // NH
    off = _slab_layout(cfg, B, S)

    kernel = functools.partial(
        fused_bert_kernel,
        B=B, S=S, H=H, NH=NH, Dh=Dh, L=L, I=I,
        scale=1.0 / math.sqrt(Dh), off=off)

    logits_pad = pl.pallas_call(
        kernel,
        out_shape=jax.ShapeDtypeStruct((B, _CLS_PAD), jnp.float32),
        in_specs=[_VMEM] * 9,
        out_specs=_VMEM,
        compiler_params=pltpu.CompilerParams(
            vmem_limit_bytes=32 * 1024 * 1024),
        # TODO(synk): for large serving batches on v7x, add grid=(B//tb,) with
        # dimension_semantics=("parallel",) to shard across both TensorCores.
    )(input_ids.reshape(B * S, 1).astype(jnp.int32),
      attention_mask.astype(jnp.int32),
      packed["slab"], packed["wqkv"], packed["wo"], packed["w1"],
      packed["w2"], packed["pool_w"], packed["cls_w"])

    return logits_pad[:, :C]  # (B, num_classes)


# --------------------------------- main ---------------------------------------

if __name__ == "__main__":
    key = jax.random.PRNGKey(0)
    k_param, k_ids, k_mask = jax.random.split(key, 3)

    B, S = 2, 8
    params = init_params(k_param, CFG)

    input_ids = jax.random.randint(k_ids, (B, S), 0, CFG["vocab_size"],
                                   dtype=jnp.int32)
    # mask: first batch fully attended, second batch has 2 padded positions
    attention_mask = jnp.array(
        [[1] * S, [1] * (S - 2) + [0, 0]], dtype=jnp.int32)

    # One-time weight packing OUTSIDE the per-call jit.
    packed = prepack_params(params, CFG, B, S)
    jax.block_until_ready(packed)

    fwd = jax.jit(functools.partial(intent_classifier_forward, cfg=CFG))
    logits = fwd(packed, input_ids, attention_mask)
    jax.block_until_ready(logits)

    assert logits.shape == (B, CFG["num_classes"])
    assert logits.dtype == jnp.float32
    print("KERNEL_OK")
</pallas_src>

<mosaic_0001>
module attributes {stable_mosaic.version = 11 : i64} {
  func.func @fused_bert_kernel(%arg0: memref<16x1xi32, #tpu.memory_space<vmem>>, %arg1: memref<2x8xi32, #tpu.memory_space<vmem>>, %arg2: memref<164x128xf32, #tpu.memory_space<vmem>>, %arg3: memref<2x32x96xbf16, #tpu.memory_space<vmem>>, %arg4: memref<2x32x32xbf16, #tpu.memory_space<vmem>>, %arg5: memref<2x32x64xbf16, #tpu.memory_space<vmem>>, %arg6: memref<2x64x32xbf16, #tpu.memory_space<vmem>>, %arg7: memref<32x32xbf16, #tpu.memory_space<vmem>>, %arg8: memref<32x128xbf16, #tpu.memory_space<vmem>>, %arg9: memref<2x128xf32, #tpu.memory_space<vmem>>) attributes {dimension_semantics = [], scalar_prefetch = 0 : i64, scratch_operands = 0 : i64, tpu.core_type = #tpu.core_type<tc>} {
    %0 = tpu.iota {dimensions = array<i32: 1>} : vector<16x128xi32>
    %c0 = arith.constant 0 : index
    %c0_0 = arith.constant 0 : index
    %1 = vector.load %arg0[%c0, %c0_0] : memref<16x1xi32, #tpu.memory_space<vmem>>, vector<16x1xi32>
    %2 = vector.broadcast %1 : vector<16x1xi32> to vector<16x128xi32>
    %3 = arith.cmpi eq, %0, %2 : vector<16x128xi32>
    %4 = arith.extui %3 : vector<16x128xi1> to vector<16x128xi32>
    %5 = arith.sitofp %4 : vector<16x128xi32> to vector<16x128xf32>
    %c0_1 = arith.constant 0 : index
    %c0_2 = arith.constant 0 : index
    %6 = vector.load %arg2[%c0_1, %c0_2] : memref<164x128xf32, #tpu.memory_space<vmem>>, vector<128x32xf32>
    %cst = arith.constant dense<0.000000e+00> : vector<16x32xf32>
    %7 = tpu.matmul %5, %6, %cst {dimension_numbers = #tpu.dot_dimension_numbers<[1], [0], [0], [1], [0, 0, 1, 1], [], []>} : vector<16x128xf32>, vector<128x32xf32>, vector<16x32xf32> -> vector<16x32xf32>
    %c128 = arith.constant 128 : index
    %c0_3 = arith.constant 0 : index
    %8 = vector.load %arg2[%c128, %c0_3] : memref<164x128xf32, #tpu.memory_space<vmem>>, vector<16x32xf32>
    %9 = arith.addf %7, %8 : vector<16x32xf32>
    %c144 = arith.constant 144 : index
    %c0_4 = arith.constant 0 : index
    %10 = vector.load %arg2[%c144, %c0_4] : memref<164x128xf32, #tpu.memory_space<vmem>>, vector<1x32xf32>
    %c145 = arith.constant 145 : index
    %c0_5 = arith.constant 0 : index
    %11 = vector.load %arg2[%c145, %c0_5] : memref<164x128xf32, #tpu.memory_space<vmem>>, vector<1x32xf32>
    %cst_6 = arith.constant dense<0.000000e+00> : vector<16xf32>
    %12 = vector.multi_reduction <add>, %9, %cst_6 [1] : vector<16x32xf32> to vector<16xf32>
    %13 = vector.shape_cast %12 : vector<16xf32> to vector<16x1xf32>
    %cst_7 = arith.constant 3.200000e+01 : f32
    %14 = vector.broadcast %cst_7 : f32 to vector<16x1xf32>
    %15 = arith.divf %13, %14 : vector<16x1xf32>
    %16 = vector.broadcast %15 : vector<16x1xf32> to vector<16x32xf32>
    %17 = arith.subf %9, %16 : vector<16x32xf32>
    %18 = arith.mulf %17, %17 : vector<16x32xf32>
    %cst_8 = arith.constant dense<0.000000e+00> : vector<16xf32>
    %19 = vector.multi_reduction <add>, %18, %cst_8 [1] : vector<16x32xf32> to vector<16xf32>
    %20 = vector.shape_cast %19 : vector<16xf32> to vector<16x1xf32>
    %cst_9 = arith.constant 3.200000e+01 : f32
    %21 = vector.broadcast %cst_9 : f32 to vector<16x1xf32>
    %22 = arith.divf %20, %21 : vector<16x1xf32>
    %cst_10 = arith.constant 9.99999996E-13 : f32
    %23 = vector.broadcast %cst_10 : f32 to vector<16x1xf32>
    %24 = arith.addf %22, %23 : vector<16x1xf32>
    %25 = math.rsqrt %24 : vector<16x1xf32>
    %26 = vector.broadcast %25 : vector<16x1xf32> to vector<16x32xf32>
    %27 = arith.mulf %17, %26 : vector<16x32xf32>
    %28 = vector.broadcast %10 : vector<1x32xf32> to vector<16x32xf32>
    %29 = arith.mulf %27, %28 : vector<16x32xf32>
    %30 = vector.broadcast %11 : vector<1x32xf32> to vector<16x32xf32>
    %31 = arith.addf %29, %30 : vector<16x32xf32>
    %c0_11 = arith.constant 0 : index
    %c0_12 = arith.constant 0 : index
    %32 = vector.load %arg1[%c0_11, %c0_12] : memref<2x8xi32, #tpu.memory_space<vmem>>, vector<2x8xi32>
    %33 = arith.sitofp %32 : vector<2x8xi32> to vector<2x8xf32>
    %cst_13 = arith.constant 1.000000e+00 : f32
    %34 = vector.broadcast %cst_13 : f32 to vector<2x8xf32>
    %35 = arith.subf %34, %33 : vector<2x8xf32>
    %cst_14 = arith.constant -1.000000e+04 : f32
    %36 = vector.broadcast %cst_14 : f32 to vector<2x8xf32>
    %37 = arith.mulf %35, %36 : vector<2x8xf32>
    %38 = vector.shape_cast %37 : vector<2x8xf32> to vector<2x1x8xf32>
    %39 = vector.shape_cast %38 : vector<2x1x8xf32> to vector<2x1x8xf32>
    %40 = vector.broadcast %39 : vector<2x1x8xf32> to vector<2x8x8xf32>
    %41 = arith.truncf %31 : vector<16x32xf32> to vector<16x32xbf16>
    %c0_15 = arith.constant 0 : index
    %c0_16 = arith.constant 0 : index
    %c0_17 = arith.constant 0 : index
    %42 = vector.load %arg3[%c0_15, %c0_16, %c0_17] : memref<2x32x96xbf16, #tpu.memory_space<vmem>>, vector<1x32x96xbf16>
    %43 = vector.shape_cast %42 : vector<1x32x96xbf16> to vector<32x96xbf16>
    %cst_18 = arith.constant dense<0.000000e+00> : vector<16x96xf32>
    %44 = tpu.matmul %41, %43, %cst_18 {dimension_numbers = #tpu.dot_dimension_numbers<[1], [0], [0], [1], [0, 0, 1, 1], [], []>} : vector<16x32xbf16>, vector<32x96xbf16>, vector<16x96xf32> -> vector<16x96xf32>
    %c146 = arith.constant 146 : index
    %c0_19 = arith.constant 0 : index
    %45 = vector.load %arg2[%c146, %c0_19] : memref<164x128xf32, #tpu.memory_space<vmem>>, vector<1x96xf32>
    %46 = vector.broadcast %45 : vector<1x96xf32> to vector<16x96xf32>
    %47 = arith.addf %44, %46 : vector<16x96xf32>
    %48 = vector.extract_strided_slice %47 {offsets = [0, 0], sizes = [16, 16], strides = [1, 1]} : vector<16x96xf32> to vector<16x16xf32>
    %49 = vector.shape_cast %48 : vector<16x16xf32> to vector<2x8x16xf32>
    %50 = vector.extract_strided_slice %47 {offsets = [0, 32], sizes = [16, 16], strides = [1, 1]} : vector<16x96xf32> to vector<16x16xf32>
    %51 = vector.shape_cast %50 : vector<16x16xf32> to vector<2x8x16xf32>
    %52 = vector.extract_strided_slice %47 {offsets = [0, 64], sizes = [16, 16], strides = [1, 1]} : vector<16x96xf32> to vector<16x16xf32>
    %53 = vector.shape_cast %52 : vector<16x16xf32> to vector<2x8x16xf32>
    %54 = arith.truncf %49 : vector<2x8x16xf32> to vector<2x8x16xbf16>
    %55 = arith.truncf %51 : vector<2x8x16xf32> to vector<2x8x16xbf16>
    %cst_20 = arith.constant dense<0.000000e+00> : vector<2x8x8xf32>
    %56 = tpu.matmul %54, %55, %cst_20 {dimension_numbers = #tpu.dot_dimension_numbers<[2], [2], [1], [1], [0, 0, 0, 1, 1, 1], [0], [0]>} : vector<2x8x16xbf16>, vector<2x8x16xbf16>, vector<2x8x8xf32> -> vector<2x8x8xf32>
    %cst_21 = arith.constant 2.500000e-01 : f32
    %57 = vector.broadcast %cst_21 : f32 to vector<2x8x8xf32>
    %58 = arith.mulf %56, %57 : vector<2x8x8xf32>
    %59 = arith.addf %58, %40 : vector<2x8x8xf32>
    %cst_22 = arith.constant dense<0xFF800000> : vector<2x8xf32>
    %60 = vector.multi_reduction <maximumf>, %59, %cst_22 [2] : vector<2x8x8xf32> to vector<2x8xf32>
    %61 = vector.shape_cast %60 : vector<2x8xf32> to vector<2x8x1xf32>
    %62 = vector.broadcast %61 : vector<2x8x1xf32> to vector<2x8x8xf32>
    %63 = arith.subf %59, %62 : vector<2x8x8xf32>
    %64 = math.exp %63 : vector<2x8x8xf32>
    %cst_23 = arith.constant dense<0.000000e+00> : vector<2x8xf32>
    %65 = vector.multi_reduction <add>, %64, %cst_23 [2] : vector<2x8x8xf32> to vector<2x8xf32>
    %66 = vector.shape_cast %65 : vector<2x8xf32> to vector<2x8x1xf32>
    %67 = tpu.reciprocal %66 {approx = true} : vector<2x8x1xf32> -> vector<2x8x1xf32>
    %68 = vector.broadcast %67 : vector<2x8x1xf32> to vector<2x8x8xf32>
    %69 = arith.mulf %64, %68 : vector<2x8x8xf32>
    %70 = arith.truncf %69 : vector<2x8x8xf32> to vector<2x8x8xbf16>
    %71 = arith.truncf %53 : vector<2x8x16xf32> to vector<2x8x16xbf16>
    %cst_24 = arith.constant dense<0.000000e+00> : vector<2x8x16xf32>
    %72 = tpu.matmul %70, %71, %cst_24 {dimension_numbers = #tpu.dot_dimension_numbers<[2], [1], [1], [2], [0, 0, 0, 1, 1, 2], [0], [0]>} : vector<2x8x8xbf16>, vector<2x8x16xbf16>, vector<2x8x16xf32> -> vector<2x8x16xf32>
    %73 = vector.shape_cast %72 : vector<2x8x16xf32> to vector<16x16xf32>
    %74 = vector.extract_strided_slice %47 {offsets = [0, 16], sizes = [16, 16], strides = [1, 1]} : vector<16x96xf32> to vector<16x16xf32>
    %75 = vector.shape_cast %74 : vector<16x16xf32> to vector<2x8x16xf32>
    %76 = vector.extract_strided_slice %47 {offsets = [0, 48], sizes = [16, 16], strides = [1, 1]} : vector<16x96xf32> to vector<16x16xf32>
    %77 = vector.shape_cast %76 : vector<16x16xf32> to vector<2x8x16xf32>
    %78 = vector.extract_strided_slice %47 {offsets = [0, 80], sizes = [16, 16], strides = [1, 1]} : vector<16x96xf32> to vector<16x16xf32>
    %79 = vector.shape_cast %78 : vector<16x16xf32> to vector<2x8x16xf32>
    %80 = arith.truncf %75 : vector<2x8x16xf32> to vector<2x8x16xbf16>
    %81 = arith.truncf %77 : vector<2x8x16xf32> to vector<2x8x16xbf16>
    %cst_25 = arith.constant dense<0.000000e+00> : vector<2x8x8xf32>
    %82 = tpu.matmul %80, %81, %cst_25 {dimension_numbers = #tpu.dot_dimension_numbers<[2], [2], [1], [1], [0, 0, 0, 1, 1, 1], [0], [0]>} : vector<2x8x16xbf16>, vector<2x8x16xbf16>, vector<2x8x8xf32> -> vector<2x8x8xf32>
    %cst_26 = arith.constant 2.500000e-01 : f32
    %83 = vector.broadcast %cst_26 : f32 to vector<2x8x8xf32>
    %84 = arith.mulf %82, %83 : vector<2x8x8xf32>
    %85 = arith.addf %84, %40 : vector<2x8x8xf32>
    %cst_27 = arith.constant dense<0xFF800000> : vector<2x8xf32>
    %86 = vector.multi_reduction <maximumf>, %85, %cst_27 [2] : vector<2x8x8xf32> to vector<2x8xf32>
    %87 = vector.shape_cast %86 : vector<2x8xf32> to vector<2x8x1xf32>
    %88 = vector.broadcast %87 : vector<2x8x1xf32> to vector<2x8x8xf32>
    %89 = arith.subf %85, %88 : vector<2x8x8xf32>
    %90 = math.exp %89 : vector<2x8x8xf32>
    %cst_28 = arith.constant dense<0.000000e+00> : vector<2x8xf32>
    %91 = vector.multi_reduction <add>, %90, %cst_28 [2] : vector<2x8x8xf32> to vector<2x8xf32>
    %92 = vector.shape_cast %91 : vector<2x8xf32> to vector<2x8x1xf32>
    %93 = tpu.reciprocal %92 {approx = true} : vector<2x8x1xf32> -> vector<2x8x1xf32>
    %94 = vector.broadcast %93 : vector<2x8x1xf32> to vector<2x8x8xf32>
    %95 = arith.mulf %90, %94 : vector<2x8x8xf32>
    %96 = arith.truncf %95 : vector<2x8x8xf32> to vector<2x8x8xbf16>
    %97 = arith.truncf %79 : vector<2x8x16xf32> to vector<2x8x16xbf16>
    %cst_29 = arith.constant dense<0.000000e+00> : vector<2x8x16xf32>
    %98 = tpu.matmul %96, %97, %cst_29 {dimension_numbers = #tpu.dot_dimension_numbers<[2], [1], [1], [2], [0, 0, 0, 1, 1, 2], [0], [0]>} : vector<2x8x8xbf16>, vector<2x8x16xbf16>, vector<2x8x16xf32> -> vector<2x8x16xf32>
    %99 = vector.shape_cast %98 : vector<2x8x16xf32> to vector<16x16xf32>
    %100 = tpu.concatenate %73, %99 in 1 : vector<16x16xf32>, vector<16x16xf32> -> vector<16x32xf32>
    %101 = arith.truncf %100 : vector<16x32xf32> to vector<16x32xbf16>
    %c0_30 = arith.constant 0 : index
    %c0_31 = arith.constant 0 : index
    %c0_32 = arith.constant 0 : index
    %102 = vector.load %arg4[%c0_30, %c0_31, %c0_32] : memref<2x32x32xbf16, #tpu.memory_space<vmem>>, vector<1x32x32xbf16>
    %103 = vector.shape_cast %102 : vector<1x32x32xbf16> to vector<32x32xbf16>
    %cst_33 = arith.constant dense<0.000000e+00> : vector<16x32xf32>
    %104 = tpu.matmul %101, %103, %cst_33 {dimension_numbers = #tpu.dot_dimension_numbers<[1], [0], [0], [1], [0, 0, 1, 1], [], []>} : vector<16x32xbf16>, vector<32x32xbf16>, vector<16x32xf32> -> vector<16x32xf32>
    %c147 = arith.constant 147 : index
    %c0_34 = arith.constant 0 : index
    %105 = vector.load %arg2[%c147, %c0_34] : memref<164x128xf32, #tpu.memory_space<vmem>>, vector<1x32xf32>
    %106 = vector.broadcast %105 : vector<1x32xf32> to vector<16x32xf32>
    %107 = arith.addf %104, %106 : vector<16x32xf32>
    %108 = arith.addf %31, %107 : vector<16x32xf32>
    %c148 = arith.constant 148 : index
    %c0_35 = arith.constant 0 : index
    %109 = vector.load %arg2[%c148, %c0_35] : memref<164x128xf32, #tpu.memory_space<vmem>>, vector<1x32xf32>
    %c149 = arith.constant 149 : index
    %c0_36 = arith.constant 0 : index
    %110 = vector.load %arg2[%c149, %c0_36] : memref<164x128xf32, #tpu.memory_space<vmem>>, vector<1x32xf32>
    %cst_37 = arith.constant dense<0.000000e+00> : vector<16xf32>
    %111 = vector.multi_reduction <add>, %108, %cst_37 [1] : vector<16x32xf32> to vector<16xf32>
    %112 = vector.shape_cast %111 : vector<16xf32> to vector<16x1xf32>
    %cst_38 = arith.constant 3.200000e+01 : f32
    %113 = vector.broadcast %cst_38 : f32 to vector<16x1xf32>
    %114 = arith.divf %112, %113 : vector<16x1xf32>
    %115 = vector.broadcast %114 : vector<16x1xf32> to vector<16x32xf32>
    %116 = arith.subf %108, %115 : vector<16x32xf32>
    %117 = arith.mulf %116, %116 : vector<16x32xf32>
    %cst_39 = arith.constant dense<0.000000e+00> : vector<16xf32>
    %118 = vector.multi_reduction <add>, %117, %cst_39 [1] : vector<16x32xf32> to vector<16xf32>
    %119 = vector.shape_cast %118 : vector<16xf32> to vector<16x1xf32>
    %cst_40 = arith.constant 3.200000e+01 : f32
    %120 = vector.broadcast %cst_40 : f32 to vector<16x1xf32>
    %121 = arith.divf %119, %120 : vector<16x1xf32>
    %cst_41 = arith.constant 9.99999996E-13 : f32
    %122 = vector.broadcast %cst_41 : f32 to vector<16x1xf32>
    %123 = arith.addf %121, %122 : vector<16x1xf32>
    %124 = math.rsqrt %123 : vector<16x1xf32>
    %125 = vector.broadcast %124 : vector<16x1xf32> to vector<16x32xf32>
    %126 = arith.mulf %116, %125 : vector<16x32xf32>
    %127 = vector.broadcast %109 : vector<1x32xf32> to vector<16x32xf32>
    %128 = arith.mulf %126, %127 : vector<16x32xf32>
    %129 = vector.broadcast %110 : vector<1x32xf32> to vector<16x32xf32>
    %130 = arith.addf %128, %129 : vector<16x32xf32>
    %131 = arith.truncf %130 : vector<16x32xf32> to vector<16x32xbf16>
    %c0_42 = arith.constant 0 : index
    %c0_43 = arith.constant 0 : index
    %c0_44 = arith.constant 0 : index
    %132 = vector.load %arg5[%c0_42, %c0_43, %c0_44] : memref<2x32x64xbf16, #tpu.memory_space<vmem>>, vector<1x32x64xbf16>
    %133 = vector.shape_cast %132 : vector<1x32x64xbf16> to vector<32x64xbf16>
    %cst_45 = arith.constant dense<0.000000e+00> : vector<16x64xf32>
    %134 = tpu.matmul %131, %133, %cst_45 {dimension_numbers = #tpu.dot_dimension_numbers<[1], [0], [0], [1], [0, 0, 1, 1], [], []>} : vector<16x32xbf16>, vector<32x64xbf16>, vector<16x64xf32> -> vector<16x64xf32>
    %c150 = arith.constant 150 : index
    %c0_46 = arith.constant 0 : index
    %135 = vector.load %arg2[%c150, %c0_46] : memref<164x128xf32, #tpu.memory_space<vmem>>, vector<1x64xf32>
    %136 = vector.broadcast %135 : vector<1x64xf32> to vector<16x64xf32>
    %137 = arith.addf %134, %136 : vector<16x64xf32>
    %cst_47 = arith.constant 5.000000e-01 : f32
    %138 = vector.broadcast %cst_47 : f32 to vector<16x64xf32>
    %139 = arith.mulf %138, %137 : vector<16x64xf32>
    %cst_48 = arith.constant 4.471500e-02 : f32
    %140 = vector.broadcast %cst_48 : f32 to vector<16x64xf32>
    %141 = arith.mulf %140, %137 : vector<16x64xf32>
    %142 = arith.mulf %141, %137 : vector<16x64xf32>
    %143 = arith.mulf %142, %137 : vector<16x64xf32>
    %144 = arith.addf %137, %143 : vector<16x64xf32>
    %cst_49 = arith.constant 0.797884583 : f32
    %145 = vector.broadcast %cst_49 : f32 to vector<16x64xf32>
    %146 = arith.mulf %145, %144 : vector<16x64xf32>
    %147 = math.tanh %146 : vector<16x64xf32>
    %cst_50 = arith.constant 1.000000e+00 : f32
    %148 = vector.broadcast %cst_50 : f32 to vector<16x64xf32>
    %149 = arith.addf %148, %147 : vector<16x64xf32>
    %150 = arith.mulf %139, %149 : vector<16x64xf32>
    %151 = arith.truncf %150 : vector<16x64xf32> to vector<16x64xbf16>
    %c0_51 = arith.constant 0 : index
    %c0_52 = arith.constant 0 : index
    %c0_53 = arith.constant 0 : index
    %152 = vector.load %arg6[%c0_51, %c0_52, %c0_53] : memref<2x64x32xbf16, #tpu.memory_space<vmem>>, vector<1x64x32xbf16>
    %153 = vector.shape_cast %152 : vector<1x64x32xbf16> to vector<64x32xbf16>
    %cst_54 = arith.constant dense<0.000000e+00> : vector<16x32xf32>
    %154 = tpu.matmul %151, %153, %cst_54 {dimension_numbers = #tpu.dot_dimension_numbers<[1], [0], [0], [1], [0, 0, 1, 1], [], []>} : vector<16x64xbf16>, vector<64x32xbf16>, vector<16x32xf32> -> vector<16x32xf32>
    %c151 = arith.constant 151 : index
    %c0_55 = arith.constant 0 : index
    %155 = vector.load %arg2[%c151, %c0_55] : memref<164x128xf32, #tpu.memory_space<vmem>>, vector<1x32xf32>
    %156 = vector.broadcast %155 : vector<1x32xf32> to vector<16x32xf32>
    %157 = arith.addf %154, %156 : vector<16x32xf32>
    %158 = arith.addf %130, %157 : vector<16x32xf32>
    %c152 = arith.constant 152 : index
    %c0_56 = arith.constant 0 : index
    %159 = vector.load %arg2[%c152, %c0_56] : memref<164x128xf32, #tpu.memory_space<vmem>>, vector<1x32xf32>
    %c153 = arith.constant 153 : index
    %c0_57 = arith.constant 0 : index
    %160 = vector.load %arg2[%c153, %c0_57] : memref<164x128xf32, #tpu.memory_space<vmem>>, vector<1x32xf32>
    %cst_58 = arith.constant dense<0.000000e+00> : vector<16xf32>
    %161 = vector.multi_reduction <add>, %158, %cst_58 [1] : vector<16x32xf32> to vector<16xf32>
    %162 = vector.shape_cast %161 : vector<16xf32> to vector<16x1xf32>
    %cst_59 = arith.constant 3.200000e+01 : f32
    %163 = vector.broadcast %cst_59 : f32 to vector<16x1xf32>
    %164 = arith.divf %162, %163 : vector<16x1xf32>
    %165 = vector.broadcast %164 : vector<16x1xf32> to vector<16x32xf32>
    %166 = arith.subf %158, %165 : vector<16x32xf32>
    %167 = arith.mulf %166, %166 : vector<16x32xf32>
    %cst_60 = arith.constant dense<0.000000e+00> : vector<16xf32>
    %168 = vector.multi_reduction <add>, %167, %cst_60 [1] : vector<16x32xf32> to vector<16xf32>
    %169 = vector.shape_cast %168 : vector<16xf32> to vector<16x1xf32>
    %cst_61 = arith.constant 3.200000e+01 : f32
    %170 = vector.broadcast %cst_61 : f32 to vector<16x1xf32>
    %171 = arith.divf %169, %170 : vector<16x1xf32>
    %cst_62 = arith.constant 9.99999996E-13 : f32
    %172 = vector.broadcast %cst_62 : f32 to vector<16x1xf32>
    %173 = arith.addf %171, %172 : vector<16x1xf32>
    %174 = math.rsqrt %173 : vector<16x1xf32>
    %175 = vector.broadcast %174 : vector<16x1xf32> to vector<16x32xf32>
    %176 = arith.mulf %166, %175 : vector<16x32xf32>
    %177 = vector.broadcast %159 : vector<1x32xf32> to vector<16x32xf32>
    %178 = arith.mulf %176, %177 : vector<16x32xf32>
    %179 = vector.broadcast %160 : vector<1x32xf32> to vector<16x32xf32>
    %180 = arith.addf %178, %179 : vector<16x32xf32>
    %181 = arith.truncf %180 : vector<16x32xf32> to vector<16x32xbf16>
    %c1 = arith.constant 1 : index
    %c0_63 = arith.constant 0 : index
    %c0_64 = arith.constant 0 : index
    %182 = vector.load %arg3[%c1, %c0_63, %c0_64] : memref<2x32x96xbf16, #tpu.memory_space<vmem>>, vector<1x32x96xbf16>
    %183 = vector.shape_cast %182 : vector<1x32x96xbf16> to vector<32x96xbf16>
    %cst_65 = arith.constant dense<0.000000e+00> : vector<16x96xf32>
    %184 = tpu.matmul %181, %183, %cst_65 {dimension_numbers = #tpu.dot_dimension_numbers<[1], [0], [0], [1], [0, 0, 1, 1], [], []>} : vector<16x32xbf16>, vector<32x96xbf16>, vector<16x96xf32> -> vector<16x96xf32>
    %c154 = arith.constant 154 : index
    %c0_66 = arith.constant 0 : index
    %185 = vector.load %arg2[%c154, %c0_66] : memref<164x128xf32, #tpu.memory_space<vmem>>, vector<1x96xf32>
    %186 = vector.broadcast %185 : vector<1x96xf32> to vector<16x96xf32>
    %187 = arith.addf %184, %186 : vector<16x96xf32>
    %188 = vector.extract_strided_slice %187 {offsets = [0, 0], sizes = [16, 16], strides = [1, 1]} : vector<16x96xf32> to vector<16x16xf32>
    %189 = vector.shape_cast %188 : vector<16x16xf32> to vector<2x8x16xf32>
    %190 = vector.extract_strided_slice %187 {offsets = [0, 32], sizes = [16, 16], strides = [1, 1]} : vector<16x96xf32> to vector<16x16xf32>
    %191 = vector.shape_cast %190 : vector<16x16xf32> to vector<2x8x16xf32>
    %192 = vector.extract_strided_slice %187 {offsets = [0, 64], sizes = [16, 16], strides = [1, 1]} : vector<16x96xf32> to vector<16x16xf32>
    %193 = vector.shape_cast %192 : vector<16x16xf32> to vector<2x8x16xf32>
    %194 = arith.truncf %189 : vector<2x8x16xf32> to vector<2x8x16xbf16>
    %195 = arith.truncf %191 : vector<2x8x16xf32> to vector<2x8x16xbf16>
    %cst_67 = arith.constant dense<0.000000e+00> : vector<2x8x8xf32>
    %196 = tpu.matmul %194, %195, %cst_67 {dimension_numbers = #tpu.dot_dimension_numbers<[2], [2], [1], [1], [0, 0, 0, 1, 1, 1], [0], [0]>} : vector<2x8x16xbf16>, vector<2x8x16xbf16>, vector<2x8x8xf32> -> vector<2x8x8xf32>
    %cst_68 = arith.constant 2.500000e-01 : f32
    %197 = vector.broadcast %cst_68 : f32 to vector<2x8x8xf32>
    %198 = arith.mulf %196, %197 : vector<2x8x8xf32>
    %199 = arith.addf %198, %40 : vector<2x8x8xf32>
    %cst_69 = arith.constant dense<0xFF800000> : vector<2x8xf32>
    %200 = vector.multi_reduction <maximumf>, %199, %cst_69 [2] : vector<2x8x8xf32> to vector<2x8xf32>
    %201 = vector.shape_cast %200 : vector<2x8xf32> to vector<2x8x1xf32>
    %202 = vector.broadcast %201 : vector<2x8x1xf32> to vector<2x8x8xf32>
    %203 = arith.subf %199, %202 : vector<2x8x8xf32>
    %204 = math.exp %203 : vector<2x8x8xf32>
    %cst_70 = arith.constant dense<0.000000e+00> : vector<2x8xf32>
    %205 = vector.multi_reduction <add>, %204, %cst_70 [2] : vector<2x8x8xf32> to vector<2x8xf32>
    %206 = vector.shape_cast %205 : vector<2x8xf32> to vector<2x8x1xf32>
    %207 = tpu.reciprocal %206 {approx = true} : vector<2x8x1xf32> -> vector<2x8x1xf32>
    %208 = vector.broadcast %207 : vector<2x8x1xf32> to vector<2x8x8xf32>
    %209 = arith.mulf %204, %208 : vector<2x8x8xf32>
    %210 = arith.truncf %209 : vector<2x8x8xf32> to vector<2x8x8xbf16>
    %211 = arith.truncf %193 : vector<2x8x16xf32> to vector<2x8x16xbf16>
    %cst_71 = arith.constant dense<0.000000e+00> : vector<2x8x16xf32>
    %212 = tpu.matmul %210, %211, %cst_71 {dimension_numbers = #tpu.dot_dimension_numbers<[2], [1], [1], [2], [0, 0, 0, 1, 1, 2], [0], [0]>} : vector<2x8x8xbf16>, vector<2x8x16xbf16>, vector<2x8x16xf32> -> vector<2x8x16xf32>
    %213 = vector.shape_cast %212 : vector<2x8x16xf32> to vector<16x16xf32>
    %214 = vector.extract_strided_slice %187 {offsets = [0, 16], sizes = [16, 16], strides = [1, 1]} : vector<16x96xf32> to vector<16x16xf32>
    %215 = vector.shape_cast %214 : vector<16x16xf32> to vector<2x8x16xf32>
    %216 = vector.extract_strided_slice %187 {offsets = [0, 48], sizes = [16, 16], strides = [1, 1]} : vector<16x96xf32> to vector<16x16xf32>
    %217 = vector.shape_cast %216 : vector<16x16xf32> to vector<2x8x16xf32>
    %218 = vector.extract_strided_slice %187 {offsets = [0, 80], sizes = [16, 16], strides = [1, 1]} : vector<16x96xf32> to vector<16x16xf32>
    %219 = vector.shape_cast %218 : vector<16x16xf32> to vector<2x8x16xf32>
    %220 = arith.truncf %215 : vector<2x8x16xf32> to vector<2x8x16xbf16>
    %221 = arith.truncf %217 : vector<2x8x16xf32> to vector<2x8x16xbf16>
    %cst_72 = arith.constant dense<0.000000e+00> : vector<2x8x8xf32>
    %222 = tpu.matmul %220, %221, %cst_72 {dimension_numbers = #tpu.dot_dimension_numbers<[2], [2], [1], [1], [0, 0, 0, 1, 1, 1], [0], [0]>} : vector<2x8x16xbf16>, vector<2x8x16xbf16>, vector<2x8x8xf32> -> vector<2x8x8xf32>
    %cst_73 = arith.constant 2.500000e-01 : f32
    %223 = vector.broadcast %cst_73 : f32 to vector<2x8x8xf32>
    %224 = arith.mulf %222, %223 : vector<2x8x8xf32>
    %225 = arith.addf %224, %40 : vector<2x8x8xf32>
    %cst_74 = arith.constant dense<0xFF800000> : vector<2x8xf32>
    %226 = vector.multi_reduction <maximumf>, %225, %cst_74 [2] : vector<2x8x8xf32> to vector<2x8xf32>
    %227 = vector.shape_cast %226 : vector<2x8xf32> to vector<2x8x1xf32>
    %228 = vector.broadcast %227 : vector<2x8x1xf32> to vector<2x8x8xf32>
    %229 = arith.subf %225, %228 : vector<2x8x8xf32>
    %230 = math.exp %229 : vector<2x8x8xf32>
    %cst_75 = arith.constant dense<0.000000e+00> : vector<2x8xf32>
    %231 = vector.multi_reduction <add>, %230, %cst_75 [2] : vector<2x8x8xf32> to vector<2x8xf32>
    %232 = vector.shape_cast %231 : vector<2x8xf32> to vector<2x8x1xf32>
    %233 = tpu.reciprocal %232 {approx = true} : vector<2x8x1xf32> -> vector<2x8x1xf32>
    %234 = vector.broadcast %233 : vector<2x8x1xf32> to vector<2x8x8xf32>
    %235 = arith.mulf %230, %234 : vector<2x8x8xf32>
    %236 = arith.truncf %235 : vector<2x8x8xf32> to vector<2x8x8xbf16>
    %237 = arith.truncf %219 : vector<2x8x16xf32> to vector<2x8x16xbf16>
    %cst_76 = arith.constant dense<0.000000e+00> : vector<2x8x16xf32>
    %238 = tpu.matmul %236, %237, %cst_76 {dimension_numbers = #tpu.dot_dimension_numbers<[2], [1], [1], [2], [0, 0, 0, 1, 1, 2], [0], [0]>} : vector<2x8x8xbf16>, vector<2x8x16xbf16>, vector<2x8x16xf32> -> vector<2x8x16xf32>
    %239 = vector.shape_cast %238 : vector<2x8x16xf32> to vector<16x16xf32>
    %240 = tpu.concatenate %213, %239 in 1 : vector<16x16xf32>, vector<16x16xf32> -> vector<16x32xf32>
    %241 = arith.truncf %240 : vector<16x32xf32> to vector<16x32xbf16>
    %c1_77 = arith.constant 1 : index
    %c0_78 = arith.constant 0 : index
    %c0_79 = arith.constant 0 : index
    %242 = vector.load %arg4[%c1_77, %c0_78, %c0_79] : memref<2x32x32xbf16, #tpu.memory_space<vmem>>, vector<1x32x32xbf16>
    %243 = vector.shape_cast %242 : vector<1x32x32xbf16> to vector<32x32xbf16>
    %cst_80 = arith.constant dense<0.000000e+00> : vector<16x32xf32>
    %244 = tpu.matmul %241, %243, %cst_80 {dimension_numbers = #tpu.dot_dimension_numbers<[1], [0], [0], [1], [0, 0, 1, 1], [], []>} : vector<16x32xbf16>, vector<32x32xbf16>, vector<16x32xf32> -> vector<16x32xf32>
    %c155 = arith.constant 155 : index
    %c0_81 = arith.constant 0 : index
    %245 = vector.load %arg2[%c155, %c0_81] : memref<164x128xf32, #tpu.memory_space<vmem>>, vector<1x32xf32>
    %246 = vector.broadcast %245 : vector<1x32xf32> to vector<16x32xf32>
    %247 = arith.addf %244, %246 : vector<16x32xf32>
    %248 = arith.addf %180, %247 : vector<16x32xf32>
    %c156 = arith.constant 156 : index
    %c0_82 = arith.constant 0 : index
    %249 = vector.load %arg2[%c156, %c0_82] : memref<164x128xf32, #tpu.memory_space<vmem>>, vector<1x32xf32>
    %c157 = arith.constant 157 : index
    %c0_83 = arith.constant 0 : index
    %250 = vector.load %arg2[%c157, %c0_83] : memref<164x128xf32, #tpu.memory_space<vmem>>, vector<1x32xf32>
    %cst_84 = arith.constant dense<0.000000e+00> : vector<16xf32>
    %251 = vector.multi_reduction <add>, %248, %cst_84 [1] : vector<16x32xf32> to vector<16xf32>
    %252 = vector.shape_cast %251 : vector<16xf32> to vector<16x1xf32>
    %cst_85 = arith.constant 3.200000e+01 : f32
    %253 = vector.broadcast %cst_85 : f32 to vector<16x1xf32>
    %254 = arith.divf %252, %253 : vector<16x1xf32>
    %255 = vector.broadcast %254 : vector<16x1xf32> to vector<16x32xf32>
    %256 = arith.subf %248, %255 : vector<16x32xf32>
    %257 = arith.mulf %256, %256 : vector<16x32xf32>
    %cst_86 = arith.constant dense<0.000000e+00> : vector<16xf32>
    %258 = vector.multi_reduction <add>, %257, %cst_86 [1] : vector<16x32xf32> to vector<16xf32>
    %259 = vector.shape_cast %258 : vector<16xf32> to vector<16x1xf32>
    %cst_87 = arith.constant 3.200000e+01 : f32
    %260 = vector.broadcast %cst_87 : f32 to vector<16x1xf32>
    %261 = arith.divf %259, %260 : vector<16x1xf32>
    %cst_88 = arith.constant 9.99999996E-13 : f32
    %262 = vector.broadcast %cst_88 : f32 to vector<16x1xf32>
    %263 = arith.addf %261, %262 : vector<16x1xf32>
    %264 = math.rsqrt %263 : vector<16x1xf32>
    %265 = vector.broadcast %264 : vector<16x1xf32> to vector<16x32xf32>
    %266 = arith.mulf %256, %265 : vector<16x32xf32>
    %267 = vector.broadcast %249 : vector<1x32xf32> to vector<16x32xf32>
    %268 = arith.mulf %266, %267 : vector<16x32xf32>
    %269 = vector.broadcast %250 : vector<1x32xf32> to vector<16x32xf32>
    %270 = arith.addf %268, %269 : vector<16x32xf32>
    %271 = arith.truncf %270 : vector<16x32xf32> to vector<16x32xbf16>
    %c1_89 = arith.constant 1 : index
    %c0_90 = arith.constant 0 : index
    %c0_91 = arith.constant 0 : index
    %272 = vector.load %arg5[%c1_89, %c0_90, %c0_91] : memref<2x32x64xbf16, #tpu.memory_space<vmem>>, vector<1x32x64xbf16>
    %273 = vector.shape_cast %272 : vector<1x32x64xbf16> to vector<32x64xbf16>
    %cst_92 = arith.constant dense<0.000000e+00> : vector<16x64xf32>
    %274 = tpu.matmul %271, %273, %cst_92 {dimension_numbers = #tpu.dot_dimension_numbers<[1], [0], [0], [1], [0, 0, 1, 1], [], []>} : vector<16x32xbf16>, vector<32x64xbf16>, vector<16x64xf32> -> vector<16x64xf32>
    %c158 = arith.constant 158 : index
    %c0_93 = arith.constant 0 : index
    %275 = vector.load %arg2[%c158, %c0_93] : memref<164x128xf32, #tpu.memory_space<vmem>>, vector<1x64xf32>
    %276 = vector.broadcast %275 : vector<1x64xf32> to vector<16x64xf32>
    %277 = arith.addf %274, %276 : vector<16x64xf32>
    %cst_94 = arith.constant 5.000000e-01 : f32
    %278 = vector.broadcast %cst_94 : f32 to vector<16x64xf32>
    %279 = arith.mulf %278, %277 : vector<16x64xf32>
    %cst_95 = arith.constant 4.471500e-02 : f32
    %280 = vector.broadcast %cst_95 : f32 to vector<16x64xf32>
    %281 = arith.mulf %280, %277 : vector<16x64xf32>
    %282 = arith.mulf %281, %277 : vector<16x64xf32>
    %283 = arith.mulf %282, %277 : vector<16x64xf32>
    %284 = arith.addf %277, %283 : vector<16x64xf32>
    %cst_96 = arith.constant 0.797884583 : f32
    %285 = vector.broadcast %cst_96 : f32 to vector<16x64xf32>
    %286 = arith.mulf %285, %284 : vector<16x64xf32>
    %287 = math.tanh %286 : vector<16x64xf32>
    %cst_97 = arith.constant 1.000000e+00 : f32
    %288 = vector.broadcast %cst_97 : f32 to vector<16x64xf32>
    %289 = arith.addf %288, %287 : vector<16x64xf32>
    %290 = arith.mulf %279, %289 : vector<16x64xf32>
    %291 = arith.truncf %290 : vector<16x64xf32> to vector<16x64xbf16>
    %c1_98 = arith.constant 1 : index
    %c0_99 = arith.constant 0 : index
    %c0_100 = arith.constant 0 : index
    %292 = vector.load %arg6[%c1_98, %c0_99, %c0_100] : memref<2x64x32xbf16, #tpu.memory_space<vmem>>, vector<1x64x32xbf16>
    %293 = vector.shape_cast %292 : vector<1x64x32xbf16> to vector<64x32xbf16>
    %cst_101 = arith.constant dense<0.000000e+00> : vector<16x32xf32>
    %294 = tpu.matmul %291, %293, %cst_101 {dimension_numbers = #tpu.dot_dimension_numbers<[1], [0], [0], [1], [0, 0, 1, 1], [], []>} : vector<16x64xbf16>, vector<64x32xbf16>, vector<16x32xf32> -> vector<16x32xf32>
    %c159 = arith.constant 159 : index
    %c0_102 = arith.constant 0 : index
    %295 = vector.load %arg2[%c159, %c0_102] : memref<164x128xf32, #tpu.memory_space<vmem>>, vector<1x32xf32>
    %296 = vector.broadcast %295 : vector<1x32xf32> to vector<16x32xf32>
    %297 = arith.addf %294, %296 : vector<16x32xf32>
    %298 = arith.addf %270, %297 : vector<16x32xf32>
    %c160 = arith.constant 160 : index
    %c0_103 = arith.constant 0 : index
    %299 = vector.load %arg2[%c160, %c0_103] : memref<164x128xf32, #tpu.memory_space<vmem>>, vector<1x32xf32>
    %c161 = arith.constant 161 : index
    %c0_104 = arith.constant 0 : index
    %300 = vector.load %arg2[%c161, %c0_104] : memref<164x128xf32, #tpu.memory_space<vmem>>, vector<1x32xf32>
    %cst_105 = arith.constant dense<0.000000e+00> : vector<16xf32>
    %301 = vector.multi_reduction <add>, %298, %cst_105 [1] : vector<16x32xf32> to vector<16xf32>
    %302 = vector.shape_cast %301 : vector<16xf32> to vector<16x1xf32>
    %cst_106 = arith.constant 3.200000e+01 : f32
    %303 = vector.broadcast %cst_106 : f32 to vector<16x1xf32>
    %304 = arith.divf %302, %303 : vector<16x1xf32>
    %305 = vector.broadcast %304 : vector<16x1xf32> to vector<16x32xf32>
    %306 = arith.subf %298, %305 : vector<16x32xf32>
    %307 = arith.mulf %306, %306 : vector<16x32xf32>
    %cst_107 = arith.constant dense<0.000000e+00> : vector<16xf32>
    %308 = vector.multi_reduction <add>, %307, %cst_107 [1] : vector<16x32xf32> to vector<16xf32>
    %309 = vector.shape_cast %308 : vector<16xf32> to vector<16x1xf32>
    %cst_108 = arith.constant 3.200000e+01 : f32
    %310 = vector.broadcast %cst_108 : f32 to vector<16x1xf32>
    %311 = arith.divf %309, %310 : vector<16x1xf32>
    %cst_109 = arith.constant 9.99999996E-13 : f32
    %312 = vector.broadcast %cst_109 : f32 to vector<16x1xf32>
    %313 = arith.addf %311, %312 : vector<16x1xf32>
    %314 = math.rsqrt %313 : vector<16x1xf32>
    %315 = vector.broadcast %314 : vector<16x1xf32> to vector<16x32xf32>
    %316 = arith.mulf %306, %315 : vector<16x32xf32>
    %317 = vector.broadcast %299 : vector<1x32xf32> to vector<16x32xf32>
    %318 = arith.mulf %316, %317 : vector<16x32xf32>
    %319 = vector.broadcast %300 : vector<1x32xf32> to vector<16x32xf32>
    %320 = arith.addf %318, %319 : vector<16x32xf32>
    %321 = vector.shape_cast %320 : vector<16x32xf32> to vector<2x8x32xf32>
    %322 = vector.extract_strided_slice %321 {offsets = [0, 0, 0], sizes = [2, 1, 32], strides = [1, 1, 1]} : vector<2x8x32xf32> to vector<2x1x32xf32>
    %323 = vector.shape_cast %322 : vector<2x1x32xf32> to vector<2x32xf32>
    %324 = arith.truncf %323 : vector<2x32xf32> to vector<2x32xbf16>
    %c0_110 = arith.constant 0 : index
    %c0_111 = arith.constant 0 : index
    %325 = vector.load %arg7[%c0_110, %c0_111] : memref<32x32xbf16, #tpu.memory_space<vmem>>, vector<32x32xbf16>
    %cst_112 = arith.constant dense<0.000000e+00> : vector<2x32xf32>
    %326 = tpu.matmul %324, %325, %cst_112 {dimension_numbers = #tpu.dot_dimension_numbers<[1], [0], [0], [1], [0, 0, 1, 1], [], []>} : vector<2x32xbf16>, vector<32x32xbf16>, vector<2x32xf32> -> vector<2x32xf32>
    %c162 = arith.constant 162 : index
    %c0_113 = arith.constant 0 : index
    %327 = vector.load %arg2[%c162, %c0_113] : memref<164x128xf32, #tpu.memory_space<vmem>>, vector<1x32xf32>
    %328 = vector.broadcast %327 : vector<1x32xf32> to vector<2x32xf32>
    %329 = arith.addf %326, %328 : vector<2x32xf32>
    %330 = math.tanh %329 : vector<2x32xf32>
    %331 = arith.truncf %330 : vector<2x32xf32> to vector<2x32xbf16>
    %c0_114 = arith.constant 0 : index
    %c0_115 = arith.constant 0 : index
    %332 = vector.load %arg8[%c0_114, %c0_115] : memref<32x128xbf16, #tpu.memory_space<vmem>>, vector<32x128xbf16>
    %cst_116 = arith.constant dense<0.000000e+00> : vector<2x128xf32>
    %333 = tpu.matmul %331, %332, %cst_116 {dimension_numbers = #tpu.dot_dimension_numbers<[1], [0], [0], [1], [0, 0, 1, 1], [], []>} : vector<2x32xbf16>, vector<32x128xbf16>, vector<2x128xf32> -> vector<2x128xf32>
    %c163 = arith.constant 163 : index
    %c0_117 = arith.constant 0 : index
    %334 = vector.load %arg2[%c163, %c0_117] : memref<164x128xf32, #tpu.memory_space<vmem>>, vector<1x128xf32>
    %335 = vector.broadcast %334 : vector<1x128xf32> to vector<2x128xf32>
    %336 = arith.addf %333, %335 : vector<2x128xf32>
    %c0_118 = arith.constant 0 : index
    %c0_119 = arith.constant 0 : index
    %337 = vector.load %arg9[%c0_118, %c0_119] : memref<2x128xf32, #tpu.memory_space<vmem>>, vector<2x128xf32>
    tpu.vector_store %arg9[%c0_118, %c0_119], %336 {strides = array<i32>} : memref<2x128xf32, #tpu.memory_space<vmem>>, vector<2x128xf32>,
    return
  }
}

</mosaic_0001>

<llo_original>
// kernel: intent_classifier_forward.1
$region0: #{intent_classifier_forward.1}
  #allocation0 [shape = 'u32[]', space=smem, size = 0x4, offset = 0x4, fixed_abs, tag = 'smem constant byte address 0x4 - core index']
  #allocation1 [shape = 'u32[72,128]{1,0:T(1,128)}', space=vmem, size = 0x9000, scoped, tag = 'internal scratch']
  %s0 = inlined_call_operand.vmem [shape: s32[16,1], index: 0, kind: input, shape index: {}]
  %s1 = inlined_call_operand.vmem [shape: s32[2,8], index: 1, kind: input, shape index: {}]
  %s2 = inlined_call_operand.hbm [shape: f32[164,128], index: 2, kind: input, shape index: {}]
  %s3 = inlined_call_operand.vmem [shape: bf16[2,32,96], index: 3, kind: input, shape index: {}]
  %s4 = inlined_call_operand.vmem [shape: bf16[2,32,32], index: 4, kind: input, shape index: {}]
  %s5 = inlined_call_operand.vmem [shape: bf16[2,32,64], index: 5, kind: input, shape index: {}]
  %s6 = inlined_call_operand.vmem [shape: bf16[2,64,32], index: 6, kind: input, shape index: {}]
  %s7 = inlined_call_operand.vmem [shape: bf16[32,32], index: 7, kind: input, shape index: {}]
  %s8 = inlined_call_operand.hbm [shape: bf16[32,128], index: 8, kind: input, shape index: {}]
  %s9 = inlined_call_operand.hbm [shape: f32[2,128], index: 9, kind: output, shape index: {}]
  %s10 = sld [smem:[#allocation0]]
  $region54: #{intent_classifier_forward.1} parent=0
    _
  %s12 = ssub.s32 1, %s10
  %s13 = scalar_select 0, %s12, %s10
  $region1: #{intent_classifier_forward.1} parent=0
    #allocation2 [shape = 'u8[86016]{0}', space=vmem, size = 0x15000, scoped, tag = 'input window, operand 2, single buffered']
    #allocation3 [shape = 's32[1]{0}', space=sflag, size = 0x4, scoped, tag = 'scoped memory for intent_classifier_forward.1']
    #allocation4 [shape = 's32[1]{0}', space=sflag, size = 0x4, scoped, tag = 'scoped memory for intent_classifier_forward.1']
    #allocation5 [shape = 'u8[8192]{0}', space=vmem, size = 0x2000, scoped, tag = 'input window, operand 8, single buffered']
    #allocation6 [shape = 's32[1]{0}', space=sflag, size = 0x4, scoped, tag = 'scoped memory for intent_classifier_forward.1']
    #allocation7 [shape = 'u8[1024]{0}', space=vmem, size = 0x400, scoped, tag = 'output window, operand 0, single buffered']
    %14 = vsyncpa [#allocation3], 0
    %15 = vsyncpa [#allocation6], 0
    %16 = vsyncpa [#allocation4], 0
    // Predicated region
    $region2: #{intent_classifier_forward.1} parent=1 // pred_check
      _
    $region3: #{intent_classifier_forward.1} parent=1 // pred_check_branch
      %18 = sbr.rel (0) target = $region5
    $region4: #{intent_classifier_forward.1} parent=1 // pred_region
      _
    $region5: #{intent_classifier_forward.1} parent=1 // pred_fallthru
      _
    // Predicated region
    $region6: #{intent_classifier_forward.1} parent=1 // pred_check
      _
    $region7: #{intent_classifier_forward.1} parent=1 // pred_check_branch
      %20 = sbr.rel (0) target = $region9
    $region8: #{intent_classifier_forward.1} parent=1 // pred_region
      _
    $region9: #{intent_classifier_forward.1} parent=1 // pred_fallthru
      _
    // Predicated region
    $region10: #{intent_classifier_forward.1} parent=1 // pred_check
      _
    $region11: #{intent_classifier_forward.1} parent=1 // pred_check_branch
      %22 = sbr.rel (0) target = $region13
    $region12: #{intent_classifier_forward.1} parent=1 // pred_region
      %24 = vsyncadd [#allocation3], 0
      %s25 = sshll.u32 %s2, 4
      %s26 = int_to_ptr.hbm [resolvable:$true] %s25
      %s27 = sshll.u32 [#allocation2], 4
      %s28 = int_to_ptr.vmem [resolvable:$true] %s27
      %33 = dma.hbm_to_vmem [thread:$0]  %s26, 2688, %s28, [#allocation3], 128, 128, 8
    $region13: #{intent_classifier_forward.1} parent=1 // pred_fallthru
      _
    // Predicated region
    $region14: #{intent_classifier_forward.1} parent=1 // pred_check
      _
    $region15: #{intent_classifier_forward.1} parent=1 // pred_check_branch
      %35 = sbr.rel (0) target = $region17
    $region16: #{intent_classifier_forward.1} parent=1 // pred_region
      _
    $region17: #{intent_classifier_forward.1} parent=1 // pred_fallthru
      _
    // Predicated region
    $region18: #{intent_classifier_forward.1} parent=1 // pred_check
      _
    $region19: #{intent_classifier_forward.1} parent=1 // pred_check_branch
      %37 = sbr.rel (0) target = $region21
    $region20: #{intent_classifier_forward.1} parent=1 // pred_region
      _
    $region21: #{intent_classifier_forward.1} parent=1 // pred_fallthru
      _
    // Predicated region
    $region22: #{intent_classifier_forward.1} parent=1 // pred_check
      _
    $region23: #{intent_classifier_forward.1} parent=1 // pred_check_branch
      %39 = sbr.rel (0) target = $region25
    $region24: #{intent_classifier_forward.1} parent=1 // pred_region
      _
    $region25: #{intent_classifier_forward.1} parent=1 // pred_fallthru
      _
    // Predicated region
    $region26: #{intent_classifier_forward.1} parent=1 // pred_check
      _
    $region27: #{intent_classifier_forward.1} parent=1 // pred_check_branch
      %41 = sbr.rel (0) target = $region29
    $region28: #{intent_classifier_forward.1} parent=1 // pred_region
      _
    $region29: #{intent_classifier_forward.1} parent=1 // pred_fallthru
      _
    // Predicated region
    $region30: #{intent_classifier_forward.1} parent=1 // pred_check
      _
    $region31: #{intent_classifier_forward.1} parent=1 // pred_check_branch
      %43 = sbr.rel (0) target = $region33
    $region32: #{intent_classifier_forward.1} parent=1 // pred_region
      _
    $region33: #{intent_classifier_forward.1} parent=1 // pred_fallthru
      _
    // Predicated region
    $region34: #{intent_classifier_forward.1} parent=1 // pred_check
      _
    $region35: #{intent_classifier_forward.1} parent=1 // pred_check_branch
      %45 = sbr.rel (0) target = $region37
    $region36: #{intent_classifier_forward.1} parent=1 // pred_region
      %47 = vsyncadd [#allocation6], 0
      %s48 = sshll.u32 %s8, 4
      %s49 = int_to_ptr.hbm [resolvable:$true] %s48
      %s50 = sshll.u32 [#allocation5], 4
      %s51 = int_to_ptr.vmem [resolvable:$true] %s50
      %56 = dma.hbm_to_vmem [thread:$0]  %s49, 256, %s51, [#allocation6], 64, 64, 4
    $region37: #{intent_classifier_forward.1} parent=1 // pred_fallthru
      _
    // Predicated region
    $region38: #{intent_classifier_forward.1} parent=1 // pred_check
      _
    $region39: #{intent_classifier_forward.1} parent=1 // pred_check_branch
      %58 = sbr.rel (0) target = $region41
    $region40: #{intent_classifier_forward.1} parent=1 // pred_region
      %60 = dma.done [#allocation3], 2688
    $region41: #{intent_classifier_forward.1} parent=1 // pred_fallthru
      _
    // Predicated region
    $region42: #{intent_classifier_forward.1} parent=1 // pred_check
      _
    $region43: #{intent_classifier_forward.1} parent=1 // pred_check_branch
      %62 = sbr.rel (0) target = $region45
    $region44: #{intent_classifier_forward.1} parent=1 // pred_region
      %64 = dma.done [#allocation6], 256
    $region45: #{intent_classifier_forward.1} parent=1 // pred_fallthru
      _
    %v66 = vlaneseq
    %v67 = vand.u32 %v66, 127
    %v68 = vld [vmem:[%s0] sm:$0xff]
    %v69 = vld [vmem:[%s0 + $0x8] sm:$0xff]
    %70 = vset.pattern.permute.xlu0 0
    %71 = vperm.xlu0 %70, %v68
    %v72 = vpop.permute.xlu0 %71
    %73 = vset.pattern.permute.xlu0 0
    %74 = vperm.xlu0 %73, %v69
    %v75 = vpop.permute.xlu0 %74
    %vm76 = vcmp.eq.s32.totalorder %v67, %v72
    %vm77 = vcmp.eq.s32.totalorder %v67, %v75
    %v78 = vsel %vm76, 1, 0
    %v79 = vsel %vm77, 1, 0
    %v80 = vcvt.s32.f32 %v78
    %v81 = vcvt.s32.f32 %v79
    %v82 = vld [vmem:[#allocation2] sm:$0xff]
    %v83 = vld [vmem:[#allocation2 + $0x8] sm:$0xff]
    %v84 = vld [vmem:[#allocation2 + $0x10] sm:$0xff]
    %v85 = vld [vmem:[#allocation2 + $0x18] sm:$0xff]
    %v86 = vld [vmem:[#allocation2 + $0x20] sm:$0xff]
    %v87 = vld [vmem:[#allocation2 + $0x28] sm:$0xff]
    %v88 = vld [vmem:[#allocation2 + $0x30] sm:$0xff]
    %v89 = vld [vmem:[#allocation2 + $0x38] sm:$0xff]
    %v90 = vld [vmem:[#allocation2 + $0x40] sm:$0xff]
    %v91 = vld [vmem:[#allocation2 + $0x48] sm:$0xff]
    %v92 = vld [vmem:[#allocation2 + $0x50] sm:$0xff]
    %v93 = vld [vmem:[#allocation2 + $0x58] sm:$0xff]
    %v94 = vld [vmem:[#allocation2 + $0x60] sm:$0xff]
    %v95 = vld [vmem:[#allocation2 + $0x68] sm:$0xff]
    %v96 = vld [vmem:[#allocation2 + $0x70] sm:$0xff]
    %v97 = vld [vmem:[#allocation2 + $0x78] sm:$0xff]
    %v98 = vld [vmem:[#allocation2 + $0x80] sm:$0xff]
    %v99 = vld [vmem:[#allocation2 + $0x88] sm:$0xff]
    %100 = vmatpush.msra.mxu0 %v97
    %101 = vmatpush.msra.mxu0 %v96
    %102 = vmatpush.msra.mxu0 %v95
    %103 = vmatpush.msra.mxu0 %v94
    %104 = vmatpush.msra.mxu0 %v93
    %105 = vmatpush.msra.mxu0 %v92
    %106 = vmatpush.msra.mxu0 %v91
    %107 = vmatpush.msra.mxu0 %v90
    %108 = vmatpush.msra.mxu0 %v89
    %109 = vmatpush.msra.mxu0 %v88
    %110 = vmatpush.msra.mxu0 %v87
    %111 = vmatpush.msra.mxu0 %v86
    %112 = vmatpush.msra.mxu0 %v85
    %113 = vmatpush.msra.mxu0 %v84
    %114 = vmatpush.msra.mxu0 %v83
    %115 = vmatpush.msra.mxu0 %v82
    %116 = vmatmul.f32.gmra.mxu0 %v80
    %v117 = vpop.f32.mrf.mxu0
    %v118 = vadd.f32 %v98, %v117
    %119 = vmatmul.f32.gmra.mxu0 %v81
    %v120 = vpop.f32.mrf.mxu0
    %v121 = vadd.f32 %v99, %v120
    %122 = vdwg.mxu0
    %v123 = vld [vmem:[#allocation2 + $0x90] sm:$0x1]
    %v124 = vld [vmem:[#allocation2 + $0x91] sm:$0x1]
    %vm125 = vcmask 261120
    %v126 = vsel %vm125, %v118, 0.0
    %127 = vadd.xlane.f32.xlu0 %v126
    %v128 = vpop.xlane.xlu0 %127
    %v129 = vsel %vm125, %v121, 0.0
    %130 = vadd.xlane.f32.xlu0 %v129
    %v131 = vpop.xlane.xlu0 %130
    %v132 = vrcp.pop 32.0
    %v133 = vmul.f32 32.0, %v132
    %v134 = vsub.f32 1.0, %v133
    %v135 = vmul.f32 %v132, %v134
    %v136 = vadd.f32 %v132, %v135
    %vm137 = vweird.f32 %v132
    %v138 = vsel %vm137, %v132, %v136
    %v139 = vmul.f32 %v128, %v138
    %v140 = vmul.f32 %v131, %v138
    %v141 = vsub.f32 %v118, %v139
    %v142 = vsub.f32 %v121, %v140
    %v143 = vmul.f32 %v141, %v141
    %v144 = vmul.f32 %v142, %v142
    %v145 = vsel %vm125, %v143, 0.0
    %146 = vadd.xlane.f32.xlu0 %v145
    %v147 = vpop.xlane.xlu0 %146
    %v148 = vsel %vm125, %v144, 0.0
    %149 = vadd.xlane.f32.xlu0 %v148
    %v150 = vpop.xlane.xlu0 %149
    %v151 = vmul.f32 %v147, %v138
    %v152 = vmul.f32 %v150, %v138
    %v153 = vadd.f32 %v151, 1e-12
    %v154 = vadd.f32 %v152, 1e-12
    %v155 = vrsqrt.pop %v153
    %v156 = vmul.f32 %v155, %v153
    %v157 = vmul.f32 %v156, %v155
    %v158 = vmul.f32 0.5, %v157
    %v159 = vsub.f32 1.5, %v158
    %v160 = vmul.f32 %v155, %v159
    %vm161 = vweird.f32 %v153
    %vm162 = vweird.f32 %v155
    %vm163 = vmor %vm161, %vm162
    %v164 = vsel %vm163, %v155, %v160
    %v165 = vrsqrt.pop %v154
    %v166 = vmul.f32 %v165, %v154
    %v167 = vmul.f32 %v166, %v165
    %v168 = vmul.f32 0.5, %v167
    %v169 = vsub.f32 1.5, %v168
    %v170 = vmul.f32 %v165, %v169
    %vm171 = vweird.f32 %v154
    %vm172 = vweird.f32 %v165
    %vm173 = vmor %vm171, %vm172
    %v174 = vsel %vm173, %v165, %v170
    %v175 = vmul.f32 %v141, %v164
    %v176 = vmul.f32 %v142, %v174
    %v177 = vperm.slane %v123, 0
    %v178 = vmul.f32 %v175, %v177
    %v179 = vmul.f32 %v176, %v177
    %v180 = vperm.slane %v124, 0
    %v181 = vadd.f32 %v178, %v180
    %v182 = vadd.f32 %v179, %v180
    %v183 = vld [vmem:[%s1] sm:$0x3]
    %v184 = vcvt.s32.f32 %v183
    %v185 = vsub.f32 1.0, %v184
    %v186 = vmul.f32 %v185, -10000.0
    %v188 = vrot.slane %v186, 1
    %v189 = vperm.slane %v186, 0
    %v190 = vperm.slane %v188, 0
    %v193 = vpack.c.bf16 %v182, %v181
    %v194 = vld [vmem:[%s3] sm:$0xf]
    %v195 = vld [vmem:[%s3 + $0x4] sm:$0xf]
    %v196 = vld [vmem:[%s3 + $0x8] sm:$0xf]
    %v197 = vld [vmem:[%s3 + $0xc] sm:$0xf]
    %v198 = vld [vmem:[#allocation2 + $0x92] sm:$0x1]
    %v199 = vperm.slane %v198, 0
    %v204 = vunpack.c.l.b16 %v194
    %v205 = vunpack.c.l.b16 %v195
    %v206 = vunpack.c.l.b16 %v196
    %v207 = vunpack.c.l.b16 %v197
    %v208 = vpack.c.b16 %v205, %v204
    %v209 = vpack.c.b16 %v207, %v206
    %v213 = vsel %vm125, %v193, 0
    %215 = vmatpush.bf16.msra.mxu0 0
    %216 = vmatpush.bf16.msra.mxu0 0
    %217 = vmatpush.bf16.msra.mxu0 0
    %218 = vmatpush.bf16.msra.mxu0 0
    %219 = vmatpush.bf16.msra.mxu0 0
    %220 = vmatpush.bf16.msra.mxu0 0
    %221 = vmatpush.bf16.msra.mxu0 %v209
    %222 = vmatpush.bf16.msra.mxu0 %v208
    %223 = vmatmul.bf16.gmra.mxu0 %v213
    %v224 = vpop.f32.mrf.mxu0
    %v225 = vadd.f32 %v199, %v224
    %v226 = vpop.f32.mrf.mxu0
    %v227 = vadd.f32 %v199, %v226
    %228 = vdwg.mxu0
    %v229 = vpack.c.bf16 %v225, %v225
    %v230 = vpack.c.bf16 %v227, %v227
    %v232 = vunpack.c.l.b16 %v229
    %v233 = vpack.c.b16 %v232, %v232
    %234 = vrot.lane.b32.xlu0 %v233, 96
    %v235 = vpop.permute.xlu0 %234
    %vm236 = vcmask 130048
    %v238 = vsel %vm236, %v229, 0
    %v241 = vsel %vm236, %v235, 0
    %243 = vmatpush.bf16.xpose.msra.mxu0 0
    %244 = vmatpush.bf16.xpose.msra.mxu0 0
    %245 = vmatpush.bf16.xpose.msra.mxu0 0
    %246 = vmatpush.bf16.xpose.msra.mxu0 0
    %247 = vmatpush.bf16.xpose.msra.mxu0 0
    %248 = vmatpush.bf16.xpose.msra.mxu0 0
    %249 = vmatpush.bf16.xpose.msra.mxu0 0
    %250 = vmatpush.bf16.xpose.msra.mxu0 %v241
    %251 = vmatmul.bf16.gmra.mxu0 %v238
    %v252 = vpop.f32.mrf.mxu0
    %v253 = vadd.f32 0.0, %v252
    %v254 = vpop.f32.mrf.mxu0
    %255 = vdwg.mxu0
    %v257 = vunpack.c.l.b16 %v230
    %v258 = vpack.c.b16 %v257, %v257
    %259 = vrot.lane.b32.xlu0 %v258, 96
    %v260 = vpop.permute.xlu0 %259
    %v262 = vsel %vm236, %v230, 0
    %v265 = vsel %vm236, %v260, 0
    %267 = vmatpush.bf16.xpose.msra.mxu0 0
    %268 = vmatpush.bf16.xpose.msra.mxu0 0
    %269 = vmatpush.bf16.xpose.msra.mxu0 0
    %270 = vmatpush.bf16.xpose.msra.mxu0 0
    %271 = vmatpush.bf16.xpose.msra.mxu0 0
    %272 = vmatpush.bf16.xpose.msra.mxu0 0
    %273 = vmatpush.bf16.xpose.msra.mxu0 0
    %274 = vmatpush.bf16.xpose.msra.mxu0 %v265
    %275 = vmatmul.bf16.gmra.mxu0 %v262
    %v276 = vpop.f32.mrf.mxu0
    %v277 = vadd.f32 0.0, %v276
    %v278 = vpop.f32.mrf.mxu0
    %279 = vdwg.mxu0
    %v280 = vmul.f32 %v253, 0.25
    %v281 = vmul.f32 %v277, 0.25
    %v282 = vadd.f32 %v280, %v189
    %v283 = vadd.f32 %v281, %v190
    %vm284 = vcmask 64512
    %v285 = vsel %vm284, %v282, -inf
    %286 = vmax.xlane.f32.xlu0 %v285
    %v287 = vpop.xlane.xlu0 %286
    %v288 = vsel %vm284, %v283, -inf
    %289 = vmax.xlane.f32.xlu0 %v288
    %v290 = vpop.xlane.xlu0 %289
    %v291 = vsub.f32 %v282, %v287
    %v292 = vsub.f32 %v283, %v290
    %v293 = vmul.f32 %v291, 1.442695
    %v294 = vpow.pop %v293
    %v295 = vmul.f32 %v292, 1.442695
    %v296 = vpow.pop %v295
    %v297 = vsel %vm284, %v294, 0.0
    %298 = vadd.xlane.f32.xlu0 %v297
    %v299 = vpop.xlane.xlu0 %298
    %v300 = vsel %vm284, %v296, 0.0
    %301 = vadd.xlane.f32.xlu0 %v300
    %v302 = vpop.xlane.xlu0 %301
    %v303 = vrcp.pop %v299
    %v304 = vrcp.pop %v302
    %v305 = vmul.f32 %v294, %v303
    %v306 = vmul.f32 %v296, %v304
    %v307 = vpack.c.bf16 %v305, %v305
    %v308 = vpack.c.bf16 %v306, %v306
    %309 = vrot.lane.b32.xlu0 %v233, 64
    %v310 = vpop.permute.xlu0 %309
    %v312 = vsel %vm284, %v307, 0
    %vm314 = vcmask 1043456
    %v316 = vsel %vm314, %v310, 0
    %318 = vmatpush.bf16.msra.mxu0 0
    %319 = vmatpush.bf16.msra.mxu0 0
    %320 = vmatpush.bf16.msra.mxu0 0
    %321 = vmatpush.bf16.msra.mxu0 0
    %322 = vmatpush.bf16.msra.mxu0 0
    %323 = vmatpush.bf16.msra.mxu0 0
    %324 = vmatpush.bf16.msra.mxu0 0
    %325 = vmatpush.bf16.msra.mxu0 %v316
    %326 = vmatmul.bf16.gmra.mxu0 %v312
    %v327 = vpop.f32.mrf.mxu0
    %v328 = vadd.f32 0.0, %v327
    %v329 = vpop.f32.mrf.mxu0
    %330 = vdwg.mxu0
    %331 = vrot.lane.b32.xlu0 %v258, 64
    %v332 = vpop.permute.xlu0 %331
    %v334 = vsel %vm284, %v308, 0
    %v337 = vsel %vm314, %v332, 0
    %339 = vmatpush.bf16.msra.mxu0 0
    %340 = vmatpush.bf16.msra.mxu0 0
    %341 = vmatpush.bf16.msra.mxu0 0
    %342 = vmatpush.bf16.msra.mxu0 0
    %343 = vmatpush.bf16.msra.mxu0 0
    %344 = vmatpush.bf16.msra.mxu0 0
    %345 = vmatpush.bf16.msra.mxu0 0
    %346 = vmatpush.bf16.msra.mxu0 %v337
    %347 = vmatmul.bf16.gmra.mxu0 %v334
    %v348 = vpop.f32.mrf.mxu0
    %v349 = vadd.f32 0.0, %v348
    %v350 = vpop.f32.mrf.mxu0
    %351 = vdwg.mxu0
    %352 = vrot.lane.b32.xlu0 %v233, 112
    %v353 = vpop.permute.xlu0 %352
    %354 = vrot.lane.b32.xlu0 %v233, 80
    %v355 = vpop.permute.xlu0 %354
    %v357 = vsel %vm236, %v353, 0
    %v360 = vsel %vm236, %v355, 0
    %362 = vmatpush.bf16.xpose.msra.mxu0 0
    %363 = vmatpush.bf16.xpose.msra.mxu0 0
    %364 = vmatpush.bf16.xpose.msra.mxu0 0
    %365 = vmatpush.bf16.xpose.msra.mxu0 0
    %366 = vmatpush.bf16.xpose.msra.mxu0 0
    %367 = vmatpush.bf16.xpose.msra.mxu0 0
    %368 = vmatpush.bf16.xpose.msra.mxu0 0
    %369 = vmatpush.bf16.xpose.msra.mxu0 %v360
    %370 = vmatmul.bf16.gmra.mxu0 %v357
    %v371 = vpop.f32.mrf.mxu0
    %v372 = vadd.f32 0.0, %v371
    %v373 = vpop.f32.mrf.mxu0
    %374 = vdwg.mxu0
    %375 = vrot.lane.b32.xlu0 %v258, 112
    %v376 = vpop.permute.xlu0 %375
    %377 = vrot.lane.b32.xlu0 %v258, 80
    %v378 = vpop.permute.xlu0 %377
    %v380 = vsel %vm236, %v376, 0
    %v383 = vsel %vm236, %v378, 0
    %385 = vmatpush.bf16.xpose.msra.mxu0 0
    %386 = vmatpush.bf16.xpose.msra.mxu0 0
    %387 = vmatpush.bf16.xpose.msra.mxu0 0
    %388 = vmatpush.bf16.xpose.msra.mxu0 0
    %389 = vmatpush.bf16.xpose.msra.mxu0 0
    %390 = vmatpush.bf16.xpose.msra.mxu0 0
    %391 = vmatpush.bf16.xpose.msra.mxu0 0
    %392 = vmatpush.bf16.xpose.msra.mxu0 %v383
    %393 = vmatmul.bf16.gmra.mxu0 %v380
    %v394 = vpop.f32.mrf.mxu0
    %v395 = vadd.f32 0.0, %v394
    %v396 = vpop.f32.mrf.mxu0
    %397 = vdwg.mxu0
    %v398 = vmul.f32 %v372, 0.25
    %v399 = vmul.f32 %v395, 0.25
    %v400 = vadd.f32 %v398, %v189
    %v401 = vadd.f32 %v399, %v190
    %v402 = vsel %vm284, %v400, -inf
    %403 = vmax.xlane.f32.xlu0 %v402
    %v404 = vpop.xlane.xlu0 %403
    %v405 = vsel %vm284, %v401, -inf
    %406 = vmax.xlane.f32.xlu0 %v405
    %v407 = vpop.xlane.xlu0 %406
    %v408 = vsub.f32 %v400, %v404
    %v409 = vsub.f32 %v401, %v407
    %v410 = vmul.f32 %v408, 1.442695
    %v411 = vpow.pop %v410
    %v412 = vmul.f32 %v409, 1.442695
    %v413 = vpow.pop %v412
    %v414 = vsel %vm284, %v411, 0.0
    %415 = vadd.xlane.f32.xlu0 %v414
    %v416 = vpop.xlane.xlu0 %415
    %v417 = vsel %vm284, %v413, 0.0
    %418 = vadd.xlane.f32.xlu0 %v417
    %v419 = vpop.xlane.xlu0 %418
    %v420 = vrcp.pop %v416
    %v421 = vrcp.pop %v419
    %v422 = vmul.f32 %v411, %v420
    %v423 = vmul.f32 %v413, %v421
    %v424 = vpack.c.bf16 %v422, %v422
    %v425 = vpack.c.bf16 %v423, %v423
    %426 = vrot.lane.b32.xlu0 %v233, 48
    %v427 = vpop.permute.xlu0 %426
    %v429 = vsel %vm284, %v424, 0
    %v432 = vsel %vm314, %v427, 0
    %434 = vmatpush.bf16.msra.mxu0 0
    %435 = vmatpush.bf16.msra.mxu0 0
    %436 = vmatpush.bf16.msra.mxu0 0
    %437 = vmatpush.bf16.msra.mxu0 0
    %438 = vmatpush.bf16.msra.mxu0 0
    %439 = vmatpush.bf16.msra.mxu0 0
    %440 = vmatpush.bf16.msra.mxu0 0
    %441 = vmatpush.bf16.msra.mxu0 %v432
    %442 = vmatmul.bf16.gmra.mxu0 %v429
    %v443 = vpop.f32.mrf.mxu0
    %v444 = vadd.f32 0.0, %v443
    %v445 = vpop.f32.mrf.mxu0
    %446 = vdwg.mxu0
    %447 = vrot.lane.b32.xlu0 %v258, 48
    %v448 = vpop.permute.xlu0 %447
    %v450 = vsel %vm284, %v425, 0
    %v453 = vsel %vm314, %v448, 0
    %455 = vmatpush.bf16.msra.mxu0 0
    %456 = vmatpush.bf16.msra.mxu0 0
    %457 = vmatpush.bf16.msra.mxu0 0
    %458 = vmatpush.bf16.msra.mxu0 0
    %459 = vmatpush.bf16.msra.mxu0 0
    %460 = vmatpush.bf16.msra.mxu0 0
    %461 = vmatpush.bf16.msra.mxu0 0
    %462 = vmatpush.bf16.msra.mxu0 %v453
    %463 = vmatmul.bf16.gmra.mxu0 %v450
    %v464 = vpop.f32.mrf.mxu0
    %v465 = vadd.f32 0.0, %v464
    %v466 = vpop.f32.mrf.mxu0
    %467 = vdwg.mxu0
    %470 = vrot.lane.b32.xlu0 %v444, 16
    %v471 = vpop.permute.xlu0 %470
    %472 = vrot.lane.b32.xlu0 %v465, 16
    %v473 = vpop.permute.xlu0 %472
    %v476 = vsel %vm236, %v328, %v471
    %v477 = vsel %vm236, %v349, %v473
    %v478 = vpack.c.bf16 %v477, %v476
    %v479 = vld [vmem:[%s4] sm:$0xf]
    %v480 = vld [vmem:[%s4 + $0x4] sm:$0xf]
    %v481 = vld [vmem:[%s4 + $0x8] sm:$0xf]
    %v482 = vld [vmem:[%s4 + $0xc] sm:$0xf]
    %v483 = vld [vmem:[#allocation2 + $0x93] sm:$0x1]
    %v484 = vperm.slane %v483, 0
    %v489 = vunpack.c.l.b16 %v479
    %v490 = vunpack.c.l.b16 %v480
    %v491 = vunpack.c.l.b16 %v481
    %v492 = vunpack.c.l.b16 %v482
    %v493 = vpack.c.b16 %v490, %v489
    %v494 = vpack.c.b16 %v492, %v491
    %v498 = vsel %vm125, %v478, 0
    %500 = vmatpush.bf16.msra.mxu0 0
    %501 = vmatpush.bf16.msra.mxu0 0
    %502 = vmatpush.bf16.msra.mxu0 0
    %503 = vmatpush.bf16.msra.mxu0 0
    %504 = vmatpush.bf16.msra.mxu0 0
    %505 = vmatpush.bf16.msra.mxu0 0
    %506 = vmatpush.bf16.msra.mxu0 %v494
    %507 = vmatpush.bf16.msra.mxu0 %v493
    %508 = vmatmul.bf16.gmra.mxu0 %v498
    %v509 = vpop.f32.mrf.mxu0
    %v510 = vadd.f32 %v484, %v509
    %v511 = vpop.f32.mrf.mxu0
    %v512 = vadd.f32 %v484, %v511
    %513 = vdwg.mxu0
    %v514 = vadd.f32 %v181, %v510
    %v515 = vadd.f32 %v182, %v512
    %v516 = vld [vmem:[#allocation2 + $0x94] sm:$0x1]
    %v517 = vld [vmem:[#allocation2 + $0x95] sm:$0x1]
    %v518 = vsel %vm125, %v514, 0.0
    %519 = vadd.xlane.f32.xlu0 %v518
    %v520 = vpop.xlane.xlu0 %519
    %v521 = vsel %vm125, %v515, 0.0
    %522 = vadd.xlane.f32.xlu0 %v521
    %v523 = vpop.xlane.xlu0 %522
    %v524 = vmul.f32 %v520, %v138
    %v525 = vmul.f32 %v523, %v138
    %v526 = vsub.f32 %v514, %v524
    %v527 = vsub.f32 %v515, %v525
    %v528 = vmul.f32 %v526, %v526
    %v529 = vmul.f32 %v527, %v527
    %v530 = vsel %vm125, %v528, 0.0
    %531 = vadd.xlane.f32.xlu0 %v530
    %v532 = vpop.xlane.xlu0 %531
    %v533 = vsel %vm125, %v529, 0.0
    %534 = vadd.xlane.f32.xlu0 %v533
    %v535 = vpop.xlane.xlu0 %534
    %v536 = vmul.f32 %v532, %v138
    %v537 = vmul.f32 %v535, %v138
    %v538 = vadd.f32 %v536, 1e-12
    %v539 = vadd.f32 %v537, 1e-12
    %v540 = vrsqrt.pop %v538
    %v541 = vmul.f32 %v540, %v538
    %v542 = vmul.f32 %v541, %v540
    %v543 = vmul.f32 0.5, %v542
    %v544 = vsub.f32 1.5, %v543
    %v545 = vmul.f32 %v540, %v544
    %vm546 = vweird.f32 %v538
    %vm547 = vweird.f32 %v540
    %vm548 = vmor %vm546, %vm547
    %v549 = vsel %vm548, %v540, %v545
    %v550 = vrsqrt.pop %v539
    %v551 = vmul.f32 %v550, %v539
    %v552 = vmul.f32 %v551, %v550
    %v553 = vmul.f32 0.5, %v552
    %v554 = vsub.f32 1.5, %v553
    %v555 = vmul.f32 %v550, %v554
    %vm556 = vweird.f32 %v539
    %vm557 = vweird.f32 %v550
    %vm558 = vmor %vm556, %vm557
    %v559 = vsel %vm558, %v550, %v555
    %v560 = vmul.f32 %v526, %v549
    %v561 = vmul.f32 %v527, %v559
    %v562 = vperm.slane %v516, 0
    %v563 = vmul.f32 %v560, %v562
    %v564 = vmul.f32 %v561, %v562
    %v565 = vperm.slane %v517, 0
    %v566 = vadd.f32 %v563, %v565
    %v567 = vadd.f32 %v564, %v565
    %v568 = vpack.c.bf16 %v567, %v566
    %v569 = vld [vmem:[%s5] sm:$0xf]
    %v570 = vld [vmem:[%s5 + $0x4] sm:$0xf]
    %v571 = vld [vmem:[%s5 + $0x8] sm:$0xf]
    %v572 = vld [vmem:[%s5 + $0xc] sm:$0xf]
    %v573 = vld [vmem:[#allocation2 + $0x96] sm:$0x1]
    %v574 = vperm.slane %v573, 0
    %v579 = vunpack.c.l.b16 %v569
    %v580 = vunpack.c.l.b16 %v570
    %v581 = vunpack.c.l.b16 %v571
    %v582 = vunpack.c.l.b16 %v572
    %v583 = vpack.c.b16 %v580, %v579
    %v584 = vpack.c.b16 %v582, %v581
    %v588 = vsel %vm125, %v568, 0
    %590 = vmatpush.bf16.msra.mxu0 0
    %591 = vmatpush.bf16.msra.mxu0 0
    %592 = vmatpush.bf16.msra.mxu0 0
    %593 = vmatpush.bf16.msra.mxu0 0
    %594 = vmatpush.bf16.msra.mxu0 0
    %595 = vmatpush.bf16.msra.mxu0 0
    %596 = vmatpush.bf16.msra.mxu0 %v584
    %597 = vmatpush.bf16.msra.mxu0 %v583
    %598 = vmatmul.bf16.gmra.mxu0 %v588
    %v599 = vpop.f32.mrf.mxu0
    %v600 = vadd.f32 %v574, %v599
    %v601 = vpop.f32.mrf.mxu0
    %v602 = vadd.f32 %v574, %v601
    %603 = vdwg.mxu0
    %v604 = vmul.f32 %v600, 0.5
    %v605 = vmul.f32 %v602, 0.5
    %v606 = vmul.f32 %v600, 0.044715
    %v607 = vmul.f32 %v602, 0.044715
    %v608 = vmul.f32 %v606, %v600
    %v609 = vmul.f32 %v607, %v602
    %v610 = vmul.f32 %v608, %v600
    %v611 = vmul.f32 %v609, %v602
    %v612 = vadd.f32 %v600, %v610
    %v613 = vadd.f32 %v602, %v611
    %v614 = vmul.f32 %v612, 0.7978846
    %v615 = vmul.f32 %v613, 0.7978846
    %v616 = vtanh.pop %v614
    %v617 = vtanh.pop %v615
    %v618 = vadd.f32 %v616, 1.0
    %v619 = vadd.f32 %v617, 1.0
    %v620 = vmul.f32 %v604, %v618
    %v621 = vmul.f32 %v605, %v619
    %v622 = vpack.c.bf16 %v621, %v620
    %v623 = vld [vmem:[%s6] sm:$0xf]
    %v624 = vld [vmem:[%s6 + $0x4] sm:$0xf]
    %v625 = vld [vmem:[%s6 + $0x8] sm:$0xf]
    %v626 = vld [vmem:[%s6 + $0xc] sm:$0xf]
    %v627 = vld [vmem:[%s6 + $0x10] sm:$0xf]
    %v628 = vld [vmem:[%s6 + $0x14] sm:$0xf]
    %v629 = vld [vmem:[%s6 + $0x18] sm:$0xf]
    %v630 = vld [vmem:[%s6 + $0x1c] sm:$0xf]
    %v631 = vld [vmem:[#allocation2 + $0x97] sm:$0x1]
    %v632 = vperm.slane %v631, 0
    %v641 = vunpack.c.l.b16 %v623
    %v642 = vunpack.c.l.b16 %v624
    %v643 = vunpack.c.l.b16 %v625
    %v644 = vunpack.c.l.b16 %v626
    %v645 = vunpack.c.l.b16 %v627
    %v646 = vunpack.c.l.b16 %v628
    %v647 = vunpack.c.l.b16 %v629
    %v648 = vunpack.c.l.b16 %v630
    %v649 = vpack.c.b16 %v642, %v641
    %v650 = vpack.c.b16 %v644, %v643
    %v651 = vpack.c.b16 %v646, %v645
    %v652 = vpack.c.b16 %v648, %v647
    %vm657 = vcmask 523264
    %v659 = vsel %vm657, %v622, 0
    %661 = vmatpush.bf16.msra.mxu0 0
    %662 = vmatpush.bf16.msra.mxu0 0
    %663 = vmatpush.bf16.msra.mxu0 0
    %664 = vmatpush.bf16.msra.mxu0 0
    %665 = vmatpush.bf16.msra.mxu0 %v652
    %666 = vmatpush.bf16.msra.mxu0 %v651
    %667 = vmatpush.bf16.msra.mxu0 %v650
    %668 = vmatpush.bf16.msra.mxu0 %v649
    %669 = vmatmul.bf16.gmra.mxu0 %v659
    %v670 = vpop.f32.mrf.mxu0
    %v671 = vadd.f32 %v632, %v670
    %v672 = vpop.f32.mrf.mxu0
    %v673 = vadd.f32 %v632, %v672
    %674 = vdwg.mxu0
    %v675 = vadd.f32 %v566, %v671
    %v676 = vadd.f32 %v567, %v673
    %v677 = vld [vmem:[#allocation2 + $0x98] sm:$0x1]
    %v678 = vld [vmem:[#allocation2 + $0x99] sm:$0x1]
    %v679 = vsel %vm125, %v675, 0.0
    %680 = vadd.xlane.f32.xlu0 %v679
    %v681 = vpop.xlane.xlu0 %680
    %v682 = vsel %vm125, %v676, 0.0
    %683 = vadd.xlane.f32.xlu0 %v682
    %v684 = vpop.xlane.xlu0 %683
    %v685 = vmul.f32 %v681, %v138
    %v686 = vmul.f32 %v684, %v138
    %v687 = vsub.f32 %v675, %v685
    %v688 = vsub.f32 %v676, %v686
    %v689 = vmul.f32 %v687, %v687
    %v690 = vmul.f32 %v688, %v688
    %v691 = vsel %vm125, %v689, 0.0
    %692 = vadd.xlane.f32.xlu0 %v691
    %v693 = vpop.xlane.xlu0 %692
    %v694 = vsel %vm125, %v690, 0.0
    %695 = vadd.xlane.f32.xlu0 %v694
    %v696 = vpop.xlane.xlu0 %695
    %v697 = vmul.f32 %v693, %v138
    %v698 = vmul.f32 %v696, %v138
    %v699 = vadd.f32 %v697, 1e-12
    %v700 = vadd.f32 %v698, 1e-12
    %v701 = vrsqrt.pop %v699
    %v702 = vmul.f32 %v701, %v699
    %v703 = vmul.f32 %v702, %v701
    %v704 = vmul.f32 0.5, %v703
    %v705 = vsub.f32 1.5, %v704
    %v706 = vmul.f32 %v701, %v705
    %vm707 = vweird.f32 %v699
    %vm708 = vweird.f32 %v701
    %vm709 = vmor %vm707, %vm708
    %v710 = vsel %vm709, %v701, %v706
    %v711 = vrsqrt.pop %v700
    %v712 = vmul.f32 %v711, %v700
    %v713 = vmul.f32 %v712, %v711
    %v714 = vmul.f32 0.5, %v713
    %v715 = vsub.f32 1.5, %v714
    %v716 = vmul.f32 %v711, %v715
    %vm717 = vweird.f32 %v700
    %vm718 = vweird.f32 %v711
    %vm719 = vmor %vm717, %vm718
    %v720 = vsel %vm719, %v711, %v716
    %v721 = vmul.f32 %v687, %v710
    %v722 = vmul.f32 %v688, %v720
    %v723 = vperm.slane %v677, 0
    %v724 = vmul.f32 %v721, %v723
    %v725 = vmul.f32 %v722, %v723
    %v726 = vperm.slane %v678, 0
    %v727 = vadd.f32 %v724, %v726
    %v728 = vadd.f32 %v725, %v726
    %v729 = vpack.c.bf16 %v728, %v727
    %s730 = scalar_lea.vmem %s3, 16
    %v731 = vld [vmem:[%s730] sm:$0xf]
    %v732 = vld [vmem:[%s730 + $0x4] sm:$0xf]
    %v733 = vld [vmem:[%s730 + $0x8] sm:$0xf]
    %v734 = vld [vmem:[%s730 + $0xc] sm:$0xf]
    %v735 = vld [vmem:[#allocation2 + $0x9a] sm:$0x1]
    %v736 = vperm.slane %v735, 0
    %v741 = vunpack.c.l.b16 %v731
    %v742 = vunpack.c.l.b16 %v732
    %v743 = vunpack.c.l.b16 %v733
    %v744 = vunpack.c.l.b16 %v734
    %v745 = vpack.c.b16 %v742, %v741
    %v746 = vpack.c.b16 %v744, %v743
    %v750 = vsel %vm125, %v729, 0
    %752 = vmatpush.bf16.msra.mxu0 0
    %753 = vmatpush.bf16.msra.mxu0 0
    %754 = vmatpush.bf16.msra.mxu0 0
    %755 = vmatpush.bf16.msra.mxu0 0
    %756 = vmatpush.bf16.msra.mxu0 0
    %757 = vmatpush.bf16.msra.mxu0 0
    %758 = vmatpush.bf16.msra.mxu0 %v746
    %759 = vmatpush.bf16.msra.mxu0 %v745
    %760 = vmatmul.bf16.gmra.mxu0 %v750
    %v761 = vpop.f32.mrf.mxu0
    %v762 = vadd.f32 %v736, %v761
    %v763 = vpop.f32.mrf.mxu0
    %v764 = vadd.f32 %v736, %v763
    %765 = vdwg.mxu0
    %v766 = vpack.c.bf16 %v762, %v762
    %v767 = vpack.c.bf16 %v764, %v764
    %v769 = vunpack.c.l.b16 %v766
    %v770 = vpack.c.b16 %v769, %v769
    %771 = vrot.lane.b32.xlu0 %v770, 96
    %v772 = vpop.permute.xlu0 %771
    %v774 = vsel %vm236, %v766, 0
    %v777 = vsel %vm236, %v772, 0
    %779 = vmatpush.bf16.xpose.msra.mxu0 0
    %780 = vmatpush.bf16.xpose.msra.mxu0 0
    %781 = vmatpush.bf16.xpose.msra.mxu0 0
    %782 = vmatpush.bf16.xpose.msra.mxu0 0
    %783 = vmatpush.bf16.xpose.msra.mxu0 0
    %784 = vmatpush.bf16.xpose.msra.mxu0 0
    %785 = vmatpush.bf16.xpose.msra.mxu0 0
    %786 = vmatpush.bf16.xpose.msra.mxu0 %v777
    %787 = vmatmul.bf16.gmra.mxu0 %v774
    %v788 = vpop.f32.mrf.mxu0
    %v789 = vadd.f32 0.0, %v788
    %v790 = vpop.f32.mrf.mxu0
    %791 = vdwg.mxu0
    %v793 = vunpack.c.l.b16 %v767
    %v794 = vpack.c.b16 %v793, %v793
    %795 = vrot.lane.b32.xlu0 %v794, 96
    %v796 = vpop.permute.xlu0 %795
    %v798 = vsel %vm236, %v767, 0
    %v801 = vsel %vm236, %v796, 0
    %803 = vmatpush.bf16.xpose.msra.mxu0 0
    %804 = vmatpush.bf16.xpose.msra.mxu0 0
    %805 = vmatpush.bf16.xpose.msra.mxu0 0
    %806 = vmatpush.bf16.xpose.msra.mxu0 0
    %807 = vmatpush.bf16.xpose.msra.mxu0 0
    %808 = vmatpush.bf16.xpose.msra.mxu0 0
    %809 = vmatpush.bf16.xpose.msra.mxu0 0
    %810 = vmatpush.bf16.xpose.msra.mxu0 %v801
    %811 = vmatmul.bf16.gmra.mxu0 %v798
    %v812 = vpop.f32.mrf.mxu0
    %v813 = vadd.f32 0.0, %v812
    %v814 = vpop.f32.mrf.mxu0
    %815 = vdwg.mxu0
    %v816 = vmul.f32 %v789, 0.25
    %v817 = vmul.f32 %v813, 0.25
    %v818 = vadd.f32 %v816, %v189
    %v819 = vadd.f32 %v817, %v190
    %v820 = vsel %vm284, %v818, -inf
    %821 = vmax.xlane.f32.xlu0 %v820
    %v822 = vpop.xlane.xlu0 %821
    %v823 = vsel %vm284, %v819, -inf
    %824 = vmax.xlane.f32.xlu0 %v823
    %v825 = vpop.xlane.xlu0 %824
    %v826 = vsub.f32 %v818, %v822
    %v827 = vsub.f32 %v819, %v825
    %v828 = vmul.f32 %v826, 1.442695
    %v829 = vpow.pop %v828
    %v830 = vmul.f32 %v827, 1.442695
    %v831 = vpow.pop %v830
    %v832 = vsel %vm284, %v829, 0.0
    %833 = vadd.xlane.f32.xlu0 %v832
    %v834 = vpop.xlane.xlu0 %833
    %v835 = vsel %vm284, %v831, 0.0
    %836 = vadd.xlane.f32.xlu0 %v835
    %v837 = vpop.xlane.xlu0 %836
    %v838 = vrcp.pop %v834
    %v839 = vrcp.pop %v837
    %v840 = vmul.f32 %v829, %v838
    %v841 = vmul.f32 %v831, %v839
    %v842 = vpack.c.bf16 %v840, %v840
    %v843 = vpack.c.bf16 %v841, %v841
    %844 = vrot.lane.b32.xlu0 %v770, 64
    %v845 = vpop.permute.xlu0 %844
    %v847 = vsel %vm284, %v842, 0
    %v850 = vsel %vm314, %v845, 0
    %852 = vmatpush.bf16.msra.mxu0 0
    %853 = vmatpush.bf16.msra.mxu0 0
    %854 = vmatpush.bf16.msra.mxu0 0
    %855 = vmatpush.bf16.msra.mxu0 0
    %856 = vmatpush.bf16.msra.mxu0 0
    %857 = vmatpush.bf16.msra.mxu0 0
    %858 = vmatpush.bf16.msra.mxu0 0
    %859 = vmatpush.bf16.msra.mxu0 %v850
    %860 = vmatmul.bf16.gmra.mxu0 %v847
    %v861 = vpop.f32.mrf.mxu0
    %v862 = vadd.f32 0.0, %v861
    %v863 = vpop.f32.mrf.mxu0
    %864 = vdwg.mxu0
    %865 = vrot.lane.b32.xlu0 %v794, 64
    %v866 = vpop.permute.xlu0 %865
    %v868 = vsel %vm284, %v843, 0
    %v871 = vsel %vm314, %v866, 0
    %873 = vmatpush.bf16.msra.mxu0 0
    %874 = vmatpush.bf16.msra.mxu0 0
    %875 = vmatpush.bf16.msra.mxu0 0
    %876 = vmatpush.bf16.msra.mxu0 0
    %877 = vmatpush.bf16.msra.mxu0 0
    %878 = vmatpush.bf16.msra.mxu0 0
    %879 = vmatpush.bf16.msra.mxu0 0
    %880 = vmatpush.bf16.msra.mxu0 %v871
    %881 = vmatmul.bf16.gmra.mxu0 %v868
    %v882 = vpop.f32.mrf.mxu0
    %v883 = vadd.f32 0.0, %v882
    %v884 = vpop.f32.mrf.mxu0
    %885 = vdwg.mxu0
    %886 = vrot.lane.b32.xlu0 %v770, 112
    %v887 = vpop.permute.xlu0 %886
    %888 = vrot.lane.b32.xlu0 %v770, 80
    %v889 = vpop.permute.xlu0 %888
    %v891 = vsel %vm236, %v887, 0
    %v894 = vsel %vm236, %v889, 0
    %896 = vmatpush.bf16.xpose.msra.mxu0 0
    %897 = vmatpush.bf16.xpose.msra.mxu0 0
    %898 = vmatpush.bf16.xpose.msra.mxu0 0
    %899 = vmatpush.bf16.xpose.msra.mxu0 0
    %900 = vmatpush.bf16.xpose.msra.mxu0 0
    %901 = vmatpush.bf16.xpose.msra.mxu0 0
    %902 = vmatpush.bf16.xpose.msra.mxu0 0
    %903 = vmatpush.bf16.xpose.msra.mxu0 %v894
    %904 = vmatmul.bf16.gmra.mxu0 %v891
    %v905 = vpop.f32.mrf.mxu0
    %v906 = vadd.f32 0.0, %v905
    %v907 = vpop.f32.mrf.mxu0
    %908 = vdwg.mxu0
    %909 = vrot.lane.b32.xlu0 %v794, 112
    %v910 = vpop.permute.xlu0 %909
    %911 = vrot.lane.b32.xlu0 %v794, 80
    %v912 = vpop.permute.xlu0 %911
    %v914 = vsel %vm236, %v910, 0
    %v917 = vsel %vm236, %v912, 0
    %919 = vmatpush.bf16.xpose.msra.mxu0 0
    %920 = vmatpush.bf16.xpose.msra.mxu0 0
    %921 = vmatpush.bf16.xpose.msra.mxu0 0
    %922 = vmatpush.bf16.xpose.msra.mxu0 0
    %923 = vmatpush.bf16.xpose.msra.mxu0 0
    %924 = vmatpush.bf16.xpose.msra.mxu0 0
    %925 = vmatpush.bf16.xpose.msra.mxu0 0
    %926 = vmatpush.bf16.xpose.msra.mxu0 %v917
    %927 = vmatmul.bf16.gmra.mxu0 %v914
    %v928 = vpop.f32.mrf.mxu0
    %v929 = vadd.f32 0.0, %v928
    %v930 = vpop.f32.mrf.mxu0
    %931 = vdwg.mxu0
    %v932 = vmul.f32 %v906, 0.25
    %v933 = vmul.f32 %v929, 0.25
    %v934 = vadd.f32 %v932, %v189
    %v935 = vadd.f32 %v933, %v190
    %v936 = vsel %vm284, %v934, -inf
    %937 = vmax.xlane.f32.xlu0 %v936
    %v938 = vpop.xlane.xlu0 %937
    %v939 = vsel %vm284, %v935, -inf
    %940 = vmax.xlane.f32.xlu0 %v939
    %v941 = vpop.xlane.xlu0 %940
    %v942 = vsub.f32 %v934, %v938
    %v943 = vsub.f32 %v935, %v941
    %v944 = vmul.f32 %v942, 1.442695
    %v945 = vpow.pop %v944
    %v946 = vmul.f32 %v943, 1.442695
    %v947 = vpow.pop %v946
    %v948 = vsel %vm284, %v945, 0.0
    %949 = vadd.xlane.f32.xlu0 %v948
    %v950 = vpop.xlane.xlu0 %949
    %v951 = vsel %vm284, %v947, 0.0
    %952 = vadd.xlane.f32.xlu0 %v951
    %v953 = vpop.xlane.xlu0 %952
    %v954 = vrcp.pop %v950
    %v955 = vrcp.pop %v953
    %v956 = vmul.f32 %v945, %v954
    %v957 = vmul.f32 %v947, %v955
    %v958 = vpack.c.bf16 %v956, %v956
    %v959 = vpack.c.bf16 %v957, %v957
    %960 = vrot.lane.b32.xlu0 %v770, 48
    %v961 = vpop.permute.xlu0 %960
    %v963 = vsel %vm284, %v958, 0
    %v966 = vsel %vm314, %v961, 0
    %968 = vmatpush.bf16.msra.mxu0 0
    %969 = vmatpush.bf16.msra.mxu0 0
    %970 = vmatpush.bf16.msra.mxu0 0
    %971 = vmatpush.bf16.msra.mxu0 0
    %972 = vmatpush.bf16.msra.mxu0 0
    %973 = vmatpush.bf16.msra.mxu0 0
    %974 = vmatpush.bf16.msra.mxu0 0
    %975 = vmatpush.bf16.msra.mxu0 %v966
    %976 = vmatmul.bf16.gmra.mxu0 %v963
    %v977 = vpop.f32.mrf.mxu0
    %v978 = vadd.f32 0.0, %v977
    %v979 = vpop.f32.mrf.mxu0
    %980 = vdwg.mxu0
    %981 = vrot.lane.b32.xlu0 %v794, 48
    %v982 = vpop.permute.xlu0 %981
    %v984 = vsel %vm284, %v959, 0
    %v987 = vsel %vm314, %v982, 0
    %989 = vmatpush.bf16.msra.mxu0 0
    %990 = vmatpush.bf16.msra.mxu0 0
    %991 = vmatpush.bf16.msra.mxu0 0
    %992 = vmatpush.bf16.msra.mxu0 0
    %993 = vmatpush.bf16.msra.mxu0 0
    %994 = vmatpush.bf16.msra.mxu0 0
    %995 = vmatpush.bf16.msra.mxu0 0
    %996 = vmatpush.bf16.msra.mxu0 %v987
    %997 = vmatmul.bf16.gmra.mxu0 %v984
    %v998 = vpop.f32.mrf.mxu0
    %v999 = vadd.f32 0.0, %v998
    %v1000 = vpop.f32.mrf.mxu0
    %1001 = vdwg.mxu0
    %1004 = vrot.lane.b32.xlu0 %v978, 16
    %v1005 = vpop.permute.xlu0 %1004
    %1006 = vrot.lane.b32.xlu0 %v999, 16
    %v1007 = vpop.permute.xlu0 %1006
    %v1010 = vsel %vm236, %v862, %v1005
    %v1011 = vsel %vm236, %v883, %v1007
    %v1012 = vpack.c.bf16 %v1011, %v1010
    %s1013 = scalar_lea.vmem %s4, 16
    %v1014 = vld [vmem:[%s1013] sm:$0xf]
    %v1015 = vld [vmem:[%s1013 + $0x4] sm:$0xf]
    %v1016 = vld [vmem:[%s1013 + $0x8] sm:$0xf]
    %v1017 = vld [vmem:[%s1013 + $0xc] sm:$0xf]
    %v1018 = vld [vmem:[#allocation2 + $0x9b] sm:$0x1]
    %v1019 = vperm.slane %v1018, 0
    %v1024 = vunpack.c.l.b16 %v1014
    %v1025 = vunpack.c.l.b16 %v1015
    %v1026 = vunpack.c.l.b16 %v1016
    %v1027 = vunpack.c.l.b16 %v1017
    %v1028 = vpack.c.b16 %v1025, %v1024
    %v1029 = vpack.c.b16 %v1027, %v1026
    %v1033 = vsel %vm125, %v1012, 0
    %1035 = vmatpush.bf16.msra.mxu0 0
    %1036 = vmatpush.bf16.msra.mxu0 0
    %1037 = vmatpush.bf16.msra.mxu0 0
    %1038 = vmatpush.bf16.msra.mxu0 0
    %1039 = vmatpush.bf16.msra.mxu0 0
    %1040 = vmatpush.bf16.msra.mxu0 0
    %1041 = vmatpush.bf16.msra.mxu0 %v1029
    %1042 = vmatpush.bf16.msra.mxu0 %v1028
    %1043 = vmatmul.bf16.gmra.mxu0 %v1033
    %v1044 = vpop.f32.mrf.mxu0
    %v1045 = vadd.f32 %v1019, %v1044
    %v1046 = vpop.f32.mrf.mxu0
    %v1047 = vadd.f32 %v1019, %v1046
    %1048 = vdwg.mxu0
    %v1049 = vadd.f32 %v727, %v1045
    %v1050 = vadd.f32 %v728, %v1047
    %v1051 = vld [vmem:[#allocation2 + $0x9c] sm:$0x1]
    %v1052 = vld [vmem:[#allocation2 + $0x9d] sm:$0x1]
    %v1053 = vsel %vm125, %v1049, 0.0
    %1054 = vadd.xlane.f32.xlu0 %v1053
    %v1055 = vpop.xlane.xlu0 %1054
    %v1056 = vsel %vm125, %v1050, 0.0
    %1057 = vadd.xlane.f32.xlu0 %v1056
    %v1058 = vpop.xlane.xlu0 %1057
    %v1059 = vmul.f32 %v1055, %v138
    %v1060 = vmul.f32 %v1058, %v138
    %v1061 = vsub.f32 %v1049, %v1059
    %v1062 = vsub.f32 %v1050, %v1060
    %v1063 = vmul.f32 %v1061, %v1061
    %v1064 = vmul.f32 %v1062, %v1062
    %v1065 = vsel %vm125, %v1063, 0.0
    %1066 = vadd.xlane.f32.xlu0 %v1065
    %v1067 = vpop.xlane.xlu0 %1066
    %v1068 = vsel %vm125, %v1064, 0.0
    %1069 = vadd.xlane.f32.xlu0 %v1068
    %v1070 = vpop.xlane.xlu0 %1069
    %v1071 = vmul.f32 %v1067, %v138
    %v1072 = vmul.f32 %v1070, %v138
    %v1073 = vadd.f32 %v1071, 1e-12
    %v1074 = vadd.f32 %v1072, 1e-12
    %v1075 = vrsqrt.pop %v1073
    %v1076 = vmul.f32 %v1075, %v1073
    %v1077 = vmul.f32 %v1076, %v1075
    %v1078 = vmul.f32 0.5, %v1077
    %v1079 = vsub.f32 1.5, %v1078
    %v1080 = vmul.f32 %v1075, %v1079
    %vm1081 = vweird.f32 %v1073
    %vm1082 = vweird.f32 %v1075
    %vm1083 = vmor %vm1081, %vm1082
    %v1084 = vsel %vm1083, %v1075, %v1080
    %v1085 = vrsqrt.pop %v1074
    %v1086 = vmul.f32 %v1085, %v1074
    %v1087 = vmul.f32 %v1086, %v1085
    %v1088 = vmul.f32 0.5, %v1087
    %v1089 = vsub.f32 1.5, %v1088
    %v1090 = vmul.f32 %v1085, %v1089
    %vm1091 = vweird.f32 %v1074
    %vm1092 = vweird.f32 %v1085
    %vm1093 = vmor %vm1091, %vm1092
    %v1094 = vsel %vm1093, %v1085, %v1090
    %v1095 = vmul.f32 %v1061, %v1084
    %v1096 = vmul.f32 %v1062, %v1094
    %v1097 = vperm.slane %v1051, 0
    %v1098 = vmul.f32 %v1095, %v1097
    %v1099 = vmul.f32 %v1096, %v1097
    %v1100 = vperm.slane %v1052, 0
    %v1101 = vadd.f32 %v1098, %v1100
    %v1102 = vadd.f32 %v1099, %v1100
    %v1103 = vpack.c.bf16 %v1102, %v1101
    %s1104 = scalar_lea.vmem %s5, 16
    %v1105 = vld [vmem:[%s1104] sm:$0xf]
    %v1106 = vld [vmem:[%s1104 + $0x4] sm:$0xf]
    %v1107 = vld [vmem:[%s1104 + $0x8] sm:$0xf]
    %v1108 = vld [vmem:[%s1104 + $0xc] sm:$0xf]
    %v1109 = vld [vmem:[#allocation2 + $0x9e] sm:$0x1]
    %v1110 = vperm.slane %v1109, 0
    %v1115 = vunpack.c.l.b16 %v1105
    %v1116 = vunpack.c.l.b16 %v1106
    %v1117 = vunpack.c.l.b16 %v1107
    %v1118 = vunpack.c.l.b16 %v1108
    %v1119 = vpack.c.b16 %v1116, %v1115
    %v1120 = vpack.c.b16 %v1118, %v1117
    %v1124 = vsel %vm125, %v1103, 0
    %1126 = vmatpush.bf16.msra.mxu0 0
    %1127 = vmatpush.bf16.msra.mxu0 0
    %1128 = vmatpush.bf16.msra.mxu0 0
    %1129 = vmatpush.bf16.msra.mxu0 0
    %1130 = vmatpush.bf16.msra.mxu0 0
    %1131 = vmatpush.bf16.msra.mxu0 0
    %1132 = vmatpush.bf16.msra.mxu0 %v1120
    %1133 = vmatpush.bf16.msra.mxu0 %v1119
    %1134 = vmatmul.bf16.gmra.mxu0 %v1124
    %v1135 = vpop.f32.mrf.mxu0
    %v1136 = vadd.f32 %v1110, %v1135
    %v1137 = vpop.f32.mrf.mxu0
    %v1138 = vadd.f32 %v1110, %v1137
    %1139 = vdwg.mxu0
    %v1140 = vmul.f32 %v1136, 0.5
    %v1141 = vmul.f32 %v1138, 0.5
    %v1142 = vmul.f32 %v1136, 0.044715
    %v1143 = vmul.f32 %v1138, 0.044715
    %v1144 = vmul.f32 %v1142, %v1136
    %v1145 = vmul.f32 %v1143, %v1138
    %v1146 = vmul.f32 %v1144, %v1136
    %v1147 = vmul.f32 %v1145, %v1138
    %v1148 = vadd.f32 %v1136, %v1146
    %v1149 = vadd.f32 %v1138, %v1147
    %v1150 = vmul.f32 %v1148, 0.7978846
    %v1151 = vmul.f32 %v1149, 0.7978846
    %v1152 = vtanh.pop %v1150
    %v1153 = vtanh.pop %v1151
    %v1154 = vadd.f32 %v1152, 1.0
    %v1155 = vadd.f32 %v1153, 1.0
    %v1156 = vmul.f32 %v1140, %v1154
    %v1157 = vmul.f32 %v1141, %v1155
    %v1158 = vpack.c.bf16 %v1157, %v1156
    %s1159 = scalar_lea.vmem %s6, 32
    %v1160 = vld [vmem:[%s1159] sm:$0xf]
    %v1161 = vld [vmem:[%s1159 + $0x4] sm:$0xf]
    %v1162 = vld [vmem:[%s1159 + $0x8] sm:$0xf]
    %v1163 = vld [vmem:[%s1159 + $0xc] sm:$0xf]
    %v1164 = vld [vmem:[%s1159 + $0x10] sm:$0xf]
    %v1165 = vld [vmem:[%s1159 + $0x14] sm:$0xf]
    %v1166 = vld [vmem:[%s1159 + $0x18] sm:$0xf]
    %v1167 = vld [vmem:[%s1159 + $0x1c] sm:$0xf]
    %v1168 = vld [vmem:[#allocation2 + $0x9f] sm:$0x1]
    %v1169 = vperm.slane %v1168, 0
    %v1178 = vunpack.c.l.b16 %v1160
    %v1179 = vunpack.c.l.b16 %v1161
    %v1180 = vunpack.c.l.b16 %v1162
    %v1181 = vunpack.c.l.b16 %v1163
    %v1182 = vunpack.c.l.b16 %v1164
    %v1183 = vunpack.c.l.b16 %v1165
    %v1184 = vunpack.c.l.b16 %v1166
    %v1185 = vunpack.c.l.b16 %v1167
    %v1186 = vpack.c.b16 %v1179, %v1178
    %v1187 = vpack.c.b16 %v1181, %v1180
    %v1188 = vpack.c.b16 %v1183, %v1182
    %v1189 = vpack.c.b16 %v1185, %v1184
    %v1195 = vsel %vm657, %v1158, 0
    %1197 = vmatpush.bf16.msra.mxu0 0
    %1198 = vmatpush.bf16.msra.mxu0 0
    %1199 = vmatpush.bf16.msra.mxu0 0
    %1200 = vmatpush.bf16.msra.mxu0 0
    %1201 = vmatpush.bf16.msra.mxu0 %v1189
    %1202 = vmatpush.bf16.msra.mxu0 %v1188
    %1203 = vmatpush.bf16.msra.mxu0 %v1187
    %1204 = vmatpush.bf16.msra.mxu0 %v1186
    %1205 = vmatmul.bf16.gmra.mxu0 %v1195
    %v1206 = vpop.f32.mrf.mxu0
    %v1207 = vadd.f32 %v1169, %v1206
    %v1208 = vpop.f32.mrf.mxu0
    %v1209 = vadd.f32 %v1169, %v1208
    %1210 = vdwg.mxu0
    %v1211 = vadd.f32 %v1101, %v1207
    %v1212 = vadd.f32 %v1102, %v1209
    %v1213 = vld [vmem:[#allocation2 + $0xa0] sm:$0x1]
    %v1214 = vld [vmem:[#allocation2 + $0xa1] sm:$0x1]
    %v1215 = vsel %vm125, %v1211, 0.0
    %1216 = vadd.xlane.f32.xlu0 %v1215
    %v1217 = vpop.xlane.xlu0 %1216
    %v1218 = vsel %vm125, %v1212, 0.0
    %1219 = vadd.xlane.f32.xlu0 %v1218
    %v1220 = vpop.xlane.xlu0 %1219
    %v1221 = vmul.f32 %v1217, %v138
    %v1222 = vmul.f32 %v1220, %v138
    %v1223 = vsub.f32 %v1211, %v1221
    %v1224 = vsub.f32 %v1212, %v1222
    %v1225 = vmul.f32 %v1223, %v1223
    %v1226 = vmul.f32 %v1224, %v1224
    %v1227 = vsel %vm125, %v1225, 0.0
    %1228 = vadd.xlane.f32.xlu0 %v1227
    %v1229 = vpop.xlane.xlu0 %1228
    %v1230 = vsel %vm125, %v1226, 0.0
    %1231 = vadd.xlane.f32.xlu0 %v1230
    %v1232 = vpop.xlane.xlu0 %1231
    %v1233 = vmul.f32 %v1229, %v138
    %v1234 = vmul.f32 %v1232, %v138
    %v1235 = vadd.f32 %v1233, 1e-12
    %v1236 = vadd.f32 %v1234, 1e-12
    %v1237 = vrsqrt.pop %v1235
    %v1238 = vmul.f32 %v1237, %v1235
    %v1239 = vmul.f32 %v1238, %v1237
    %v1240 = vmul.f32 0.5, %v1239
    %v1241 = vsub.f32 1.5, %v1240
    %v1242 = vmul.f32 %v1237, %v1241
    %vm1243 = vweird.f32 %v1235
    %vm1244 = vweird.f32 %v1237
    %vm1245 = vmor %vm1243, %vm1244
    %v1246 = vsel %vm1245, %v1237, %v1242
    %v1247 = vrsqrt.pop %v1236
    %v1248 = vmul.f32 %v1247, %v1236
    %v1249 = vmul.f32 %v1248, %v1247
    %v1250 = vmul.f32 0.5, %v1249
    %v1251 = vsub.f32 1.5, %v1250
    %v1252 = vmul.f32 %v1247, %v1251
    %vm1253 = vweird.f32 %v1236
    %vm1254 = vweird.f32 %v1247
    %vm1255 = vmor %vm1253, %vm1254
    %v1256 = vsel %vm1255, %v1247, %v1252
    %v1257 = vmul.f32 %v1223, %v1246
    %v1258 = vmul.f32 %v1224, %v1256
    %v1259 = vperm.slane %v1213, 0
    %v1260 = vmul.f32 %v1257, %v1259
    %v1261 = vmul.f32 %v1258, %v1259
    %v1262 = vperm.slane %v1214, 0
    %v1263 = vadd.f32 %v1260, %v1262
    %v1264 = vadd.f32 %v1261, %v1262
    %v1265 = vpack.c.bf16 %v1263, %v1263
    %v1266 = vpack.c.bf16 %v1264, %v1264
    %v1267 = vld [vmem:[%s7] sm:$0xf]
    %v1268 = vld [vmem:[%s7 + $0x4] sm:$0xf]
    %v1269 = vld [vmem:[%s7 + $0x8] sm:$0xf]
    %v1270 = vld [vmem:[%s7 + $0xc] sm:$0xf]
    %v1271 = vld [vmem:[#allocation2 + $0xa2] sm:$0x1]
    %v1272 = vperm.slane %v1271, 0
    %v1275 = vunpack.c.l.b16 %v1265
    %v1276 = vunpack.c.l.b16 %v1266
    %v1277 = vrot.slane %v1276, 7
    %vm1278 = vcmask 1041409
    %v1279 = vsel %vm1278, %v1277, %v1275
    %v1280 = vpack.c.b16 %v1279, %v1279
    %v1285 = vunpack.c.l.b16 %v1267
    %v1286 = vunpack.c.l.b16 %v1268
    %v1287 = vunpack.c.l.b16 %v1269
    %v1288 = vunpack.c.l.b16 %v1270
    %v1289 = vpack.c.b16 %v1286, %v1285
    %v1290 = vpack.c.b16 %v1288, %v1287
    %v1294 = vsel %vm125, %v1280, 0
    %1296 = vmatpush.bf16.msra.mxu0 0
    %1297 = vmatpush.bf16.msra.mxu0 0
    %1298 = vmatpush.bf16.msra.mxu0 0
    %1299 = vmatpush.bf16.msra.mxu0 0
    %1300 = vmatpush.bf16.msra.mxu0 0
    %1301 = vmatpush.bf16.msra.mxu0 0
    %1302 = vmatpush.bf16.msra.mxu0 %v1290
    %1303 = vmatpush.bf16.msra.mxu0 %v1289
    %1304 = vmatmul.bf16.gmra.mxu0 %v1294
    %v1305 = vpop.f32.mrf.mxu0
    %v1306 = vadd.f32 %v1272, %v1305
    %v1307 = vpop.f32.mrf.mxu0
    %1308 = vdwg.mxu0
    %v1309 = vtanh.pop %v1306
    %v1310 = vpack.c.bf16 %v1309, %v1309
    %v1311 = vld [vmem:[#allocation5] sm:$0xf]
    %v1312 = vld [vmem:[#allocation5 + $0x4] sm:$0xf]
    %v1313 = vld [vmem:[#allocation5 + $0x8] sm:$0xf]
    %v1314 = vld [vmem:[#allocation5 + $0xc] sm:$0xf]
    %v1315 = vld [vmem:[#allocation2 + $0xa3] sm:$0x1]
    %v1316 = vperm.slane %v1315, 0
    %v1321 = vunpack.c.l.b16 %v1311
    %v1322 = vunpack.c.l.b16 %v1312
    %v1323 = vunpack.c.l.b16 %v1313
    %v1324 = vunpack.c.l.b16 %v1314
    %v1325 = vpack.c.b16 %v1322, %v1321
    %v1326 = vpack.c.b16 %v1324, %v1323
    %v1330 = vsel %vm125, %v1310, 0
    %1332 = vmatpush.bf16.msra.mxu0 0
    %1333 = vmatpush.bf16.msra.mxu0 0
    %1334 = vmatpush.bf16.msra.mxu0 0
    %1335 = vmatpush.bf16.msra.mxu0 0
    %1336 = vmatpush.bf16.msra.mxu0 0
    %1337 = vmatpush.bf16.msra.mxu0 0
    %1338 = vmatpush.bf16.msra.mxu0 %v1326
    %1339 = vmatpush.bf16.msra.mxu0 %v1325
    %1340 = vmatmul.bf16.gmra.mxu0 %v1330
    %v1341 = vpop.f32.mrf.mxu0
    %v1342 = vadd.f32 %v1316, %v1341
    %v1343 = vpop.f32.mrf.mxu0
    %1344 = vdwg.mxu0
    %1345 = vst [vmem:[#allocation7] sm:$0x3] %v1342
    // Predicated region
    $region46: #{intent_classifier_forward.1} parent=1 // pred_check
      _
    $region47: #{intent_classifier_forward.1} parent=1 // pred_check_branch
      %1347 = sbr.rel (0) target = $region49
    $region48: #{intent_classifier_forward.1} parent=1 // pred_region
      %1349 = vsyncadd [#allocation4], 0
      %s1351 = sshll.u32 [#allocation7], 4
      %s1352 = int_to_ptr.vmem [resolvable:$true] %s1351
      %s1353 = sshll.u32 %s9, 4
      %s1354 = int_to_ptr.hbm [resolvable:$true] %s1353
      %1356 = dma.vmem_to_hbm [thread:$0]  %s1352, 32, %s1354, [#allocation4]
    $region49: #{intent_classifier_forward.1} parent=1 // pred_fallthru
      _
    // Predicated region
    $region50: #{intent_classifier_forward.1} parent=1 // pred_check
      _
    $region51: #{intent_classifier_forward.1} parent=1 // pred_check_branch
      %1358 = sbr.rel (0) target = $region53
    $region52: #{intent_classifier_forward.1} parent=1 // pred_region
      %1360 = dma.done [#allocation4], 32
    $region53: #{intent_classifier_forward.1} parent=1 // pred_fallthru
      _
    %1361 = vsyncpa [#allocation3], 1
    %1362 = vsyncpa [#allocation6], 1
    %1363 = vsyncpa [#allocation4], 1

</llo_original>
